<compile_context>
chip_gen: v6e
topology: v6e:2x2x1
jax: 0.10.0
libtpu: 0.0.40
codegen_flags: <defaults>
</compile_context>

<pallas_src>
from functools import partial

import jax
import jax.numpy as jnp
from jax import lax
from jax.experimental import pallas as pl
from jax.experimental.pallas import tpu as pltpu


def _round_up(a, b):
    return (a + b - 1) // b * b


def _cdiv(a, b):
    return (a + b - 1) // b


# --------------------------------------------------------------------------
# Kernels
# --------------------------------------------------------------------------
def _matmul_bias_kernel(a_ref, w_ref, b_ref, o_ref, acc_ref, *, precision):
    # a_ref: (TM, TK) im2col patches      w_ref: (TK, TN) weights
    # b_ref: (1, TN)  bias (f32)          o_ref: (TM, TN) output tile
    # acc_ref: (TM, TN) f32 VMEM accumulator (resident across the K axis)
    k = pl.program_id(2)

    @pl.when(k == 0)
    def _():
        acc_ref[...] = jnp.zeros_like(acc_ref)

    acc_ref[...] += jnp.dot(
        a_ref[...], w_ref[...],
        preferred_element_type=jnp.float32,
        precision=precision,
    )

    @pl.when(k == pl.num_programs(2) - 1)
    def _():
        o_ref[...] = (acc_ref[...] + b_ref[...]).astype(o_ref.dtype)


def _avgpool2x2_kernel(x_ref, y_ref, *, C):
    # x_ref: (TR, 2, Wo, 2C)  H-pair on axis 1, even/odd W columns interleaved
    #                         on the lane axis ([..., :C] = even, [..., C:] = odd)
    # y_ref: (TR, Wo, C)
    x = x_ref[...].astype(jnp.float32)
    e = x[..., :C]
    o = x[..., C:]
    s = e[:, 0] + e[:, 1] + o[:, 0] + o[:, 1]
    y_ref[...] = (s * 0.25).astype(y_ref.dtype)


# --------------------------------------------------------------------------
# Conv wrapper
# --------------------------------------------------------------------------
def _pick_tk(K, max_tk):
    """Largest lane-dense (multiple-of-128) TK <= max_tk minimising K padding."""
    kp = _round_up(K, 128)
    if kp <= max_tk:
        return kp
    cands = list(range(512, max_tk + 1, 128))
    waste = [_round_up(K, c) - K for c in cands]
    best = min(waste)
    return max(c for c, w in zip(cands, waste) if w == best)


def _conv_downsample(x_nhwc, weight, bias, padding, precision):
    N, H, W, C = x_nhwc.shape
    Cout = weight.shape[0]
    dtype = x_nhwc.dtype
    itemsize = jnp.dtype(dtype).itemsize

    if padding == 0:
        # PyTorch: F.pad(x, (0, 1, 0, 1)) on NCHW -> pad W right / H bottom by 1
        x_nhwc = jnp.pad(x_nhwc, ((0, 0), (0, 1), (0, 1), (0, 0)))
    elif padding > 0:
        x_nhwc = jnp.pad(
            x_nhwc, ((0, 0), (padding, padding), (padding, padding), (0, 0)))

    Hp, Wp = x_nhwc.shape[1], x_nhwc.shape[2]
    Ho = (Hp - 3) // 2 + 1
    Wo = (Wp - 3) // 2 + 1
    M, K = N * Ho * Wo, 9 * C

    # ---- tile selection (VMEM-budgeted, works on v5e / v6e / v7x) ----------
    Cout_pad = _round_up(Cout, 128)
    TN = Cout_pad if Cout_pad <= 2048 else 512   # one N tile in practice
    TM_target = 1024 if itemsize <= 2 else 512
    max_tk = 2048 if itemsize <= 2 else 1024
    budget = 44 << 20                            # keep under v7x's 64 MiB VMEM
    while True:
        TK = _pick_tk(K, max_tk)
        nM = max(1, _cdiv(M, TM_target))
        TM = _round_up(_cdiv(M, nM), 8)          # minimal M-padding waste
        est = ((2 * TM * TK + 2 * TK * TN + 2 * TM * TN) * itemsize
               + TM * TN * 4 + 2 * 8 * TN * 4)
        if est <= budget or (TM_target <= 128 and max_tk <= 512):
            break
        if max_tk > 512:
            max_tk //= 2
        else:
            TM_target //= 2

    K_pad = _round_up(K, TK)
    M_pad = nM * TM

    # ---- single-materialisation im2col slab, K-order = (kh, kw, cin) -------
    parts = [x_nhwc[:, kh:kh + 2 * Ho:2, kw:kw + 2 * Wo:2, :].reshape(M, C)
             for kh in range(3) for kw in range(3)]
    if K_pad > K:
        parts.append(jnp.zeros((M, K_pad - K), dtype))
    patches = jnp.concatenate(parts, axis=1)          # (M, K_pad) in one pass
    if M_pad > M:                                     # rare (M % 8 != 0)
        patches = jnp.pad(patches, ((0, M_pad - M), (0, 0)))

    # (Cout, Cin, kh, kw) -> (kh, kw, Cin, Cout) -> (9*C, Cout)  (small arrays)
    w2 = jnp.transpose(weight, (2, 3, 1, 0)).reshape(K, Cout).astype(dtype)
    w2 = jnp.pad(w2, ((0, K_pad - K), (0, Cout_pad - Cout)))
    b2 = jnp.pad(bias.astype(jnp.float32).reshape(1, Cout),
                 ((0, 0), (0, Cout_pad - Cout)))

    grid = (M_pad // TM, Cout_pad // TN, K_pad // TK)   # N axis is 1 in practice
    vmem_limit = int(min(60 << 20, max(32 << 20, est + (8 << 20))))

    out = pl.pallas_call(
        partial(_matmul_bias_kernel, precision=precision),
        out_shape=jax.ShapeDtypeStruct((M_pad, Cout_pad), dtype),
        grid=grid,
        in_specs=[
            pl.BlockSpec((TM, TK), lambda i, j, k: (i, k)),
            pl.BlockSpec((TK, TN), lambda i, j, k: (k, j)),
            pl.BlockSpec((1, TN), lambda i, j, k: (0, j)),
        ],
        out_specs=pl.BlockSpec((TM, TN), lambda i, j, k: (i, j)),
        scratch_shapes=[pltpu.VMEM((TM, TN), jnp.float32)],
        compiler_params=pltpu.CompilerParams(
            dimension_semantics=("parallel", "parallel", "arbitrary"),
            vmem_limit_bytes=vmem_limit),
    )(patches, w2, b2)

    return out[:M, :Cout].reshape(N, Ho, Wo, Cout)


# --------------------------------------------------------------------------
# AvgPool wrapper
# --------------------------------------------------------------------------
def _avgpool_downsample(x_nhwc):
    N, H, W, C = x_nhwc.shape
    Ho, Wo = H // 2, W // 2
    dtype = x_nhwc.dtype
    itemsize = jnp.dtype(dtype).itemsize

    x = x_nhwc[:, :2 * Ho, :2 * Wo, :]          # AvgPool2d floors odd H / W
    # Free contiguous reshape: H-pair -> small axis 1, W-parity folded into the
    # lane axis (2*C).  Single input, ~1x input HBM traffic (no parity copies).
    x = x.reshape(N * Ho, 2, Wo, 2 * C)

    R = N * Ho
    # ~4 MiB input blocks (account for (8,128) tile padding of the last 2 dims)
    row_bytes = 2 * _round_up(Wo, 8) * _round_up(2 * C, 128) * itemsize
    TR_cap = max(1, (4 << 20) // row_bytes)
    nR = _cdiv(R, TR_cap)
    TR = _cdiv(R, nR)
    R_pad = nR * TR
    if R_pad > R:                                # at most nR-1 padded rows
        x = jnp.pad(x, ((0, R_pad - R), (0, 0), (0, 0), (0, 0)))

    in_block = TR * 2 * _round_up(Wo, 8) * _round_up(2 * C, 128) * itemsize
    out_block = TR * _round_up(Wo, 8) * _round_up(C, 128) * itemsize
    est = 2 * in_block + 2 * out_block
    vmem_limit = int(min(60 << 20, max(24 << 20, est + (8 << 20))))

    out = pl.pallas_call(
        partial(_avgpool2x2_kernel, C=C),
        out_shape=jax.ShapeDtypeStruct((R_pad, Wo, C), dtype),
        grid=(nR,),
        in_specs=[pl.BlockSpec((TR, 2, Wo, 2 * C), lambda r: (r, 0, 0, 0))],
        out_specs=pl.BlockSpec((TR, Wo, C), lambda r: (r, 0, 0)),
        compiler_params=pltpu.CompilerParams(
            dimension_semantics=("parallel",),
            vmem_limit_bytes=vmem_limit),
    )(x)

    return out[:R].reshape(N, Ho, Wo, C)


# --------------------------------------------------------------------------
# Public entry point
# --------------------------------------------------------------------------
def downsample2d(x_nchw, params, *, use_conv, padding=1, precision=None):
    """Forward pass of Downsample2D.  x_nchw: (N, C, H, W)."""
    x = jnp.transpose(x_nchw, (0, 2, 3, 1))  # -> NHWC (channels on lanes)
    if use_conv:
        out = _conv_downsample(x, params["weight"], params["bias"],
                               padding, precision)
    else:
        out = _avgpool_downsample(x)
    return jnp.transpose(out, (0, 3, 1, 2))  # back to NCHW


# --------------------------------------------------------------------------
# Self-test
# --------------------------------------------------------------------------
if __name__ == "__main__":
    key = jax.random.PRNGKey(0)
    N, C, H, W = 2, 4, 16, 16
    Cout = C  # out_channels defaults to channels
    kx, kw_, kb = jax.random.split(key, 3)

    x = jax.random.normal(kx, (N, C, H, W), jnp.float32)

    # deterministic Conv2d(channels, out_channels, 3, stride=2, padding=1) params
    fan_in = C * 3 * 3
    bound = 1.0 / (fan_in ** 0.5)
    weight = jax.random.uniform(kw_, (Cout, C, 3, 3), jnp.float32, -bound, bound)
    bias = jax.random.uniform(kb, (Cout,), jnp.float32, -bound, bound)
    params = {"weight": weight, "bias": bias}

    HI = jax.lax.Precision.HIGHEST  # only to match the f32 reference numerics

    # --- use_conv=True, padding=1 (usual conv downsample), f32 ---
    out_conv = jax.block_until_ready(
        downsample2d(x, params, use_conv=True, padding=1, precision=HI))
    ref_conv = lax.conv_general_dilated(
        x, weight, (2, 2), ((1, 1), (1, 1)),
        dimension_numbers=("NCHW", "OIHW", "NCHW"),
        precision=HI,
    ) + bias.reshape(1, -1, 1, 1)
    assert out_conv.shape == (N, Cout, H // 2, W // 2)
    assert jnp.allclose(out_conv, ref_conv, atol=1e-4, rtol=1e-4)

    # --- use_conv=True, padding=0 (asymmetric F.pad (0,1,0,1) path), f32 ---
    out_conv0 = jax.block_until_ready(
        downsample2d(x, params, use_conv=True, padding=0, precision=HI))
    x_pad = jnp.pad(x, ((0, 0), (0, 0), (0, 1), (0, 1)))
    ref_conv0 = lax.conv_general_dilated(
        x_pad, weight, (2, 2), "VALID",
        dimension_numbers=("NCHW", "OIHW", "NCHW"),
        precision=HI,
    ) + bias.reshape(1, -1, 1, 1)
    assert out_conv0.shape == ref_conv0.shape
    assert jnp.allclose(out_conv0, ref_conv0, atol=1e-4, rtol=1e-4)

    # --- recommended fast path: bf16 MXU inputs, f32 accumulation ---
    xb = x.astype(jnp.bfloat16)
    wb = weight.astype(jnp.bfloat16)
    out_bf = jax.block_until_ready(
        downsample2d(xb, {"weight": wb, "bias": bias}, use_conv=True, padding=1))
    ref_bf = (lax.conv_general_dilated(
        xb, wb, (2, 2), ((1, 1), (1, 1)),
        dimension_numbers=("NCHW", "OIHW", "NCHW"),
        preferred_element_type=jnp.float32,
    ) + bias.reshape(1, -1, 1, 1)).astype(jnp.bfloat16)
    assert out_bf.dtype == jnp.bfloat16
    assert jnp.allclose(out_bf.astype(jnp.float32), ref_bf.astype(jnp.float32),
                        atol=2e-2, rtol=2e-2)

    # --- use_conv=False: AvgPool2d(kernel_size=2, stride=2) ---
    out_pool = jax.block_until_ready(downsample2d(x, None, use_conv=False))
    ref_pool = x.reshape(N, C, H // 2, 2, W // 2, 2).mean(axis=(3, 5))
    assert out_pool.shape == (N, C, H // 2, W // 2)
    assert jnp.allclose(out_pool, ref_pool, atol=1e-5, rtol=1e-5)

    print("KERNEL_OK")
</pallas_src>

<mosaic_0001>
module attributes {stable_mosaic.version = 11 : i64} {
  func.func @_matmul_bias_kernel(%arg0: i32, %arg1: i32, %arg2: i32, %arg3: memref<128x128xf32, #tpu.memory_space<vmem>>, %arg4: memref<128x128xf32, #tpu.memory_space<vmem>>, %arg5: memref<1x128xf32, #tpu.memory_space<vmem>>, %arg6: memref<128x128xf32, #tpu.memory_space<vmem>>, %arg7: memref<128x128xf32, #tpu.memory_space<vmem>>) attributes {dimension_semantics = [#tpu.dimension_semantics<parallel>, #tpu.dimension_semantics<parallel>, #tpu.dimension_semantics<arbitrary>], iteration_bounds = array<i64: 1, 1, 1>, scalar_prefetch = 0 : i64, scratch_operands = 1 : i64, tpu.core_type = #tpu.core_type<tc>, window_params = [{transform_indices = @transform_0, window_bounds = array<i64: 128, 128>}, {transform_indices = @transform_1, window_bounds = array<i64: 128, 128>}, {transform_indices = @transform_2, window_bounds = array<i64: 1, 128>}, {transform_indices = @transform_3, window_bounds = array<i64: 128, 128>}]} {
    %c0_i32 = arith.constant 0 : i32
    %0 = arith.cmpi eq, %arg2, %c0_i32 : i32
    %1 = arith.extui %0 : i1 to i32
    %c0_i32_0 = arith.constant 0 : i32
    %2 = arith.cmpi ne, %1, %c0_i32_0 : i32
    scf.if %2 {
      %cst_10 = arith.constant 0.000000e+00 : f32
      %12 = vector.broadcast %cst_10 : f32 to vector<128x128xf32>
      %c0_11 = arith.constant 0 : index
      %c0_12 = arith.constant 0 : index
      %13 = vector.load %arg7[%c0_11, %c0_12] : memref<128x128xf32, #tpu.memory_space<vmem>>, vector<128x128xf32>
      tpu.vector_store %arg7[%c0_11, %c0_12], %12 {strides = array<i32>} : memref<128x128xf32, #tpu.memory_space<vmem>>, vector<128x128xf32>,
    } else {
    }
    %c0 = arith.constant 0 : index
    %c0_1 = arith.constant 0 : index
    %3 = vector.load %arg7[%c0, %c0_1] : memref<128x128xf32, #tpu.memory_space<vmem>>, vector<128x128xf32>
    %c0_2 = arith.constant 0 : index
    %c0_3 = arith.constant 0 : index
    %4 = vector.load %arg3[%c0_2, %c0_3] : memref<128x128xf32, #tpu.memory_space<vmem>>, vector<128x128xf32>
    %c0_4 = arith.constant 0 : index
    %c0_5 = arith.constant 0 : index
    %5 = vector.load %arg4[%c0_4, %c0_5] : memref<128x128xf32, #tpu.memory_space<vmem>>, vector<128x128xf32>
    %cst = arith.constant dense<0.000000e+00> : vector<128x128xf32>
    %6 = tpu.matmul %4, %5, %cst {dimension_numbers = #tpu.dot_dimension_numbers<[1], [0], [0], [1], [0, 0, 1, 1], [], []>, precision = #tpu.contract_precision<fp32>} : vector<128x128xf32>, vector<128x128xf32>, vector<128x128xf32> -> vector<128x128xf32>
    %7 = arith.addf %3, %6 : vector<128x128xf32>
    %c0_6 = arith.constant 0 : index
    %c0_7 = arith.constant 0 : index
    %8 = vector.load %arg7[%c0_6, %c0_7] : memref<128x128xf32, #tpu.memory_space<vmem>>, vector<128x128xf32>
    tpu.vector_store %arg7[%c0_6, %c0_7], %7 {strides = array<i32>} : memref<128x128xf32, #tpu.memory_space<vmem>>, vector<128x128xf32>,
    %c0_i32_8 = arith.constant 0 : i32
    %9 = arith.cmpi eq, %arg2, %c0_i32_8 : i32
    %10 = arith.extui %9 : i1 to i32
    %c0_i32_9 = arith.constant 0 : i32
    %11 = arith.cmpi ne, %10, %c0_i32_9 : i32
    scf.if %11 {
      %c0_10 = arith.constant 0 : index
      %c0_11 = arith.constant 0 : index
      %12 = vector.load %arg7[%c0_10, %c0_11] : memref<128x128xf32, #tpu.memory_space<vmem>>, vector<128x128xf32>
      %c0_12 = arith.constant 0 : index
      %c0_13 = arith.constant 0 : index
      %13 = vector.load %arg5[%c0_12, %c0_13] : memref<1x128xf32, #tpu.memory_space<vmem>>, vector<1x128xf32>
      %14 = vector.broadcast %13 : vector<1x128xf32> to vector<128x128xf32>
      %15 = arith.addf %12, %14 : vector<128x128xf32>
      %c0_14 = arith.constant 0 : index
      %c0_15 = arith.constant 0 : index
      %16 = vector.load %arg6[%c0_14, %c0_15] : memref<128x128xf32, #tpu.memory_space<vmem>>, vector<128x128xf32>
      tpu.vector_store %arg6[%c0_14, %c0_15], %15 {strides = array<i32>} : memref<128x128xf32, #tpu.memory_space<vmem>>, vector<128x128xf32>,
    } else {
    }
    return
  }
  func.func @transform_0(%arg0: i32, %arg1: i32, %arg2: i32) -> (i32, i32) {
    %c0_i32 = arith.constant 0 : i32
    return %arg0, %arg2 : i32, i32
  }
  func.func @transform_1(%arg0: i32, %arg1: i32, %arg2: i32) -> (i32, i32) {
    %c0_i32 = arith.constant 0 : i32
    return %arg2, %arg1 : i32, i32
  }
  func.func @transform_2(%arg0: i32, %arg1: i32, %arg2: i32) -> (i32, i32) {
    %c0_i32 = arith.constant 0 : i32
    %c0_i32_0 = arith.constant 0 : i32
    return %c0_i32, %arg1 : i32, i32
  }
  func.func @transform_3(%arg0: i32, %arg1: i32, %arg2: i32) -> (i32, i32) {
    %c0_i32 = arith.constant 0 : i32
    return %arg0, %arg1 : i32, i32
  }
}

</mosaic_0001>

<llo_original>
// kernel: tpu_custom_call.1
$region0: #{tpu_custom_call.1}
  #allocation0 [shape = 'u32[]', space=smem, size = 0x4, offset = 0x4, fixed_abs, tag = 'smem constant byte address 0x4 - core index']
  #allocation1 [shape = 'u32[144,128]{1,0:T(1,128)}', space=vmem, size = 0x12000, scoped, tag = 'internal scratch']
  #allocation2 [shape = 'f32[128,128]{1,0:T(8,128)}', space=vmem, size = 0x10000, scoped, tag = 'scratch operand']
  %s0 = inlined_call_operand.hbm [shape: f32[128,128], index: 0, kind: input, shape index: {}]
  %s1 = inlined_call_operand.hbm [shape: f32[128,128], index: 1, kind: input, shape index: {}]
  %s2 = inlined_call_operand.vmem [shape: f32[1,128], index: 2, kind: input, shape index: {}]
  %s3 = inlined_call_operand.hbm [shape: f32[128,128], index: 3, kind: output, shape index: {}]
  %s4 = sld [smem:[#allocation0]]
  $region38: #{tpu_custom_call.1} parent=0
    _
  %s6 = ssub.s32 1, %s4
  %s7 = scalar_select 0, %s6, %s4
  $region1: #{tpu_custom_call.1} parent=0
    #allocation3 [shape = 'u8[65536]{0}', space=vmem, size = 0x10000, scoped, tag = 'input window, operand 0, single buffered']
    #allocation4 [shape = 's32[1]{0}', space=sflag, size = 0x4, scoped, tag = 'scoped memory for tpu_custom_call.1']
    #allocation5 [shape = 's32[1]{0}', space=sflag, size = 0x4, scoped, tag = 'scoped memory for tpu_custom_call.1']
    #allocation6 [shape = 'u8[65536]{0}', space=vmem, size = 0x10000, scoped, tag = 'input window, operand 1, single buffered']
    #allocation7 [shape = 's32[1]{0}', space=sflag, size = 0x4, scoped, tag = 'scoped memory for tpu_custom_call.1']
    #allocation8 [shape = 'u8[65536]{0}', space=vmem, size = 0x10000, scoped, tag = 'output window, operand 0, single buffered']
    %8 = vsyncpa [#allocation4], 0
    %9 = vsyncpa [#allocation7], 0
    %10 = vsyncpa [#allocation5], 0
    // Predicated region
    $region2: #{tpu_custom_call.1} parent=1 // pred_check
      _
    $region3: #{tpu_custom_call.1} parent=1 // pred_check_branch
      %12 = sbr.rel (0) target = $region5
    $region4: #{tpu_custom_call.1} parent=1 // pred_region
      %s14 = ssub.s32 2048, 2048
      %15 = vsyncadd [#allocation4], %s14
      %s16 = sshll.u32 [#allocation3], 4
      %s17 = int_to_ptr.vmem [resolvable:$true] %s16
      %22 = dma.hbm_to_vmem [thread:$0]  %s0, 2048, %s17, [#allocation4], 128, 128, 8
    $region5: #{tpu_custom_call.1} parent=1 // pred_fallthru
      _
    // Predicated region
    $region6: #{tpu_custom_call.1} parent=1 // pred_check
      _
    $region7: #{tpu_custom_call.1} parent=1 // pred_check_branch
      %24 = sbr.rel (0) target = $region9
    $region8: #{tpu_custom_call.1} parent=1 // pred_region
      %s26 = ssub.s32 2048, 2048
      %27 = vsyncadd [#allocation7], %s26
      %s28 = sshll.u32 [#allocation6], 4
      %s29 = int_to_ptr.vmem [resolvable:$true] %s28
      %34 = dma.hbm_to_vmem [thread:$0]  %s1, 2048, %s29, [#allocation7], 128, 128, 8
    $region9: #{tpu_custom_call.1} parent=1 // pred_fallthru
      _
    // Predicated region
    $region10: #{tpu_custom_call.1} parent=1 // pred_check
      _
    $region11: #{tpu_custom_call.1} parent=1 // pred_check_branch
      %36 = sbr.rel (0) target = $region13
    $region12: #{tpu_custom_call.1} parent=1 // pred_region
      _
    $region13: #{tpu_custom_call.1} parent=1 // pred_fallthru
      _
    // Predicated region
    $region14: #{tpu_custom_call.1} parent=1 // pred_check
      _
    $region15: #{tpu_custom_call.1} parent=1 // pred_check_branch
      %38 = sbr.rel (0) target = $region17
    $region16: #{tpu_custom_call.1} parent=1 // pred_region
      %39 = dma.done [#allocation4], 2048
    $region17: #{tpu_custom_call.1} parent=1 // pred_fallthru
      _
    // Predicated region
    $region18: #{tpu_custom_call.1} parent=1 // pred_check
      _
    $region19: #{tpu_custom_call.1} parent=1 // pred_check_branch
      %41 = sbr.rel (0) target = $region21
    $region20: #{tpu_custom_call.1} parent=1 // pred_region
      %42 = dma.done [#allocation7], 2048
    $region21: #{tpu_custom_call.1} parent=1 // pred_fallthru
      _
    %p43 = scmp.eq.s32.totalorder 0, 0
    // Predicated region
    $region22: #{tpu_custom_call.1} parent=1 // pred_check
      %p44 = pneg %p43
    $region23: #{tpu_custom_call.1} parent=1 // pred_check_branch
      %46 = sbr.rel (%p44) target = $region25
    $region24: #{tpu_custom_call.1} parent=1 // pred_region
      %47 = vst [vmem:[#allocation2] sm:$0xff] 0.0
      %48 = vst [vmem:[#allocation2 + $0x8] sm:$0xff] 0.0
      %49 = vst [vmem:[#allocation2 + $0x10] sm:$0xff] 0.0
      %50 = vst [vmem:[#allocation2 + $0x18] sm:$0xff] 0.0
      %51 = vst [vmem:[#allocation2 + $0x20] sm:$0xff] 0.0
      %52 = vst [vmem:[#allocation2 + $0x28] sm:$0xff] 0.0
      %53 = vst [vmem:[#allocation2 + $0x30] sm:$0xff] 0.0
      %54 = vst [vmem:[#allocation2 + $0x38] sm:$0xff] 0.0
      %55 = vst [vmem:[#allocation2 + $0x40] sm:$0xff] 0.0
      %56 = vst [vmem:[#allocation2 + $0x48] sm:$0xff] 0.0
      %57 = vst [vmem:[#allocation2 + $0x50] sm:$0xff] 0.0
      %58 = vst [vmem:[#allocation2 + $0x58] sm:$0xff] 0.0
      %59 = vst [vmem:[#allocation2 + $0x60] sm:$0xff] 0.0
      %60 = vst [vmem:[#allocation2 + $0x68] sm:$0xff] 0.0
      %61 = vst [vmem:[#allocation2 + $0x70] sm:$0xff] 0.0
      %62 = vst [vmem:[#allocation2 + $0x78] sm:$0xff] 0.0
    $region25: #{tpu_custom_call.1} parent=1 // pred_fallthru
      _
    %v63 = vld [vmem:[#allocation2] sm:$0xff]
    %v64 = vld [vmem:[#allocation2 + $0x8] sm:$0xff]
    %v65 = vld [vmem:[#allocation2 + $0x10] sm:$0xff]
    %v66 = vld [vmem:[#allocation2 + $0x18] sm:$0xff]
    %v67 = vld [vmem:[#allocation2 + $0x20] sm:$0xff]
    %v68 = vld [vmem:[#allocation2 + $0x28] sm:$0xff]
    %v69 = vld [vmem:[#allocation2 + $0x30] sm:$0xff]
    %v70 = vld [vmem:[#allocation2 + $0x38] sm:$0xff]
    %v71 = vld [vmem:[#allocation2 + $0x40] sm:$0xff]
    %v72 = vld [vmem:[#allocation2 + $0x48] sm:$0xff]
    %v73 = vld [vmem:[#allocation2 + $0x50] sm:$0xff]
    %v74 = vld [vmem:[#allocation2 + $0x58] sm:$0xff]
    %v75 = vld [vmem:[#allocation2 + $0x60] sm:$0xff]
    %v76 = vld [vmem:[#allocation2 + $0x68] sm:$0xff]
    %v77 = vld [vmem:[#allocation2 + $0x70] sm:$0xff]
    %v78 = vld [vmem:[#allocation2 + $0x78] sm:$0xff]
    %v79 = vld [vmem:[#allocation3] sm:$0xff]
    %v80 = vld [vmem:[#allocation3 + $0x8] sm:$0xff]
    %v81 = vld [vmem:[#allocation3 + $0x10] sm:$0xff]
    %v82 = vld [vmem:[#allocation3 + $0x18] sm:$0xff]
    %v83 = vld [vmem:[#allocation3 + $0x20] sm:$0xff]
    %v84 = vld [vmem:[#allocation3 + $0x28] sm:$0xff]
    %v85 = vld [vmem:[#allocation3 + $0x30] sm:$0xff]
    %v86 = vld [vmem:[#allocation3 + $0x38] sm:$0xff]
    %v87 = vld [vmem:[#allocation3 + $0x40] sm:$0xff]
    %v88 = vld [vmem:[#allocation3 + $0x48] sm:$0xff]
    %v89 = vld [vmem:[#allocation3 + $0x50] sm:$0xff]
    %v90 = vld [vmem:[#allocation3 + $0x58] sm:$0xff]
    %v91 = vld [vmem:[#allocation3 + $0x60] sm:$0xff]
    %v92 = vld [vmem:[#allocation3 + $0x68] sm:$0xff]
    %v93 = vld [vmem:[#allocation3 + $0x70] sm:$0xff]
    %v94 = vld [vmem:[#allocation3 + $0x78] sm:$0xff]
    %v95 = vld [vmem:[#allocation6] sm:$0xff]
    %v96 = vld [vmem:[#allocation6 + $0x8] sm:$0xff]
    %v97 = vld [vmem:[#allocation6 + $0x10] sm:$0xff]
    %v98 = vld [vmem:[#allocation6 + $0x18] sm:$0xff]
    %v99 = vld [vmem:[#allocation6 + $0x20] sm:$0xff]
    %v100 = vld [vmem:[#allocation6 + $0x28] sm:$0xff]
    %v101 = vld [vmem:[#allocation6 + $0x30] sm:$0xff]
    %v102 = vld [vmem:[#allocation6 + $0x38] sm:$0xff]
    %v103 = vld [vmem:[#allocation6 + $0x40] sm:$0xff]
    %v104 = vld [vmem:[#allocation6 + $0x48] sm:$0xff]
    %v105 = vld [vmem:[#allocation6 + $0x50] sm:$0xff]
    %v106 = vld [vmem:[#allocation6 + $0x58] sm:$0xff]
    %v107 = vld [vmem:[#allocation6 + $0x60] sm:$0xff]
    %v108 = vld [vmem:[#allocation6 + $0x68] sm:$0xff]
    %v109 = vld [vmem:[#allocation6 + $0x70] sm:$0xff]
    %v110 = vld [vmem:[#allocation6 + $0x78] sm:$0xff]
    %111 = vmatprep.subr.mxu0 0.0
    %v112 = vand.u32 %v110, 4294901760
    %113 = vmatpush1.msra.mxu0 %v112
    %114 = vmatprep.subr.mxu0 0.0
    %v115 = vand.u32 %v109, 4294901760
    %116 = vmatpush1.msra.mxu0 %v115
    %117 = vmatprep.subr.mxu0 0.0
    %v118 = vand.u32 %v108, 4294901760
    %119 = vmatpush1.msra.mxu0 %v118
    %120 = vmatprep.subr.mxu0 0.0
    %v121 = vand.u32 %v107, 4294901760
    %122 = vmatpush1.msra.mxu0 %v121
    %123 = vmatprep.subr.mxu0 0.0
    %v124 = vand.u32 %v106, 4294901760
    %125 = vmatpush1.msra.mxu0 %v124
    %126 = vmatprep.subr.mxu0 0.0
    %v127 = vand.u32 %v105, 4294901760
    %128 = vmatpush1.msra.mxu0 %v127
    %129 = vmatprep.subr.mxu0 0.0
    %v130 = vand.u32 %v104, 4294901760
    %131 = vmatpush1.msra.mxu0 %v130
    %132 = vmatprep.subr.mxu0 0.0
    %v133 = vand.u32 %v103, 4294901760
    %134 = vmatpush1.msra.mxu0 %v133
    %135 = vmatprep.subr.mxu0 0.0
    %v136 = vand.u32 %v102, 4294901760
    %137 = vmatpush1.msra.mxu0 %v136
    %138 = vmatprep.subr.mxu0 0.0
    %v139 = vand.u32 %v101, 4294901760
    %140 = vmatpush1.msra.mxu0 %v139
    %141 = vmatprep.subr.mxu0 0.0
    %v142 = vand.u32 %v100, 4294901760
    %143 = vmatpush1.msra.mxu0 %v142
    %144 = vmatprep.subr.mxu0 0.0
    %v145 = vand.u32 %v99, 4294901760
    %146 = vmatpush1.msra.mxu0 %v145
    %147 = vmatprep.subr.mxu0 0.0
    %v148 = vand.u32 %v98, 4294901760
    %149 = vmatpush1.msra.mxu0 %v148
    %150 = vmatprep.subr.mxu0 0.0
    %v151 = vand.u32 %v97, 4294901760
    %152 = vmatpush1.msra.mxu0 %v151
    %153 = vmatprep.subr.mxu0 0.0
    %v154 = vand.u32 %v96, 4294901760
    %155 = vmatpush1.msra.mxu0 %v154
    %156 = vmatprep.subr.mxu0 0.0
    %v157 = vand.u32 %v95, 4294901760
    %158 = vmatpush1.msra.mxu0 %v157
    %159 = vmatprep.subr.mxu0 0.0
    %160 = vmatpush2.msra.mxu0 0.0
    %161 = vmatprep.subr.mxu0 0.0
    %162 = vmatpush2.msra.mxu0 0.0
    %163 = vmatprep.subr.mxu0 0.0
    %164 = vmatpush2.msra.mxu0 0.0
    %165 = vmatprep.subr.mxu0 0.0
    %166 = vmatpush2.msra.mxu0 0.0
    %167 = vmatprep.subr.mxu0 0.0
    %168 = vmatpush2.msra.mxu0 0.0
    %169 = vmatprep.subr.mxu0 0.0
    %170 = vmatpush2.msra.mxu0 0.0
    %171 = vmatprep.subr.mxu0 0.0
    %172 = vmatpush2.msra.mxu0 0.0
    %173 = vmatprep.subr.mxu0 0.0
    %174 = vmatpush2.msra.mxu0 0.0
    %175 = vmatprep.subr.mxu0 0.0
    %176 = vmatpush2.msra.mxu0 0.0
    %177 = vmatprep.subr.mxu0 0.0
    %178 = vmatpush2.msra.mxu0 0.0
    %179 = vmatprep.subr.mxu0 0.0
    %180 = vmatpush2.msra.mxu0 0.0
    %181 = vmatprep.subr.mxu0 0.0
    %182 = vmatpush2.msra.mxu0 0.0
    %183 = vmatprep.subr.mxu0 0.0
    %184 = vmatpush2.msra.mxu0 0.0
    %185 = vmatprep.subr.mxu0 0.0
    %186 = vmatpush2.msra.mxu0 0.0
    %187 = vmatprep.subr.mxu0 0.0
    %188 = vmatpush2.msra.mxu0 0.0
    %189 = vmatprep.subr.mxu0 0.0
    %190 = vmatpush2.msra.mxu0 0.0
    %191 = vmatprep.mubr.f32.mxu0 0.0
    %v192 = vand.u32 %v79, 4294901760
    %v193 = vsub.f32 %v79, %v192
    %v194 = vand.u32 %v193, 4294901760
    %v195 = vsub.f32 %v193, %v194
    %v196 = vand.u32 %v195, 4294901760
    %197 = vmatmul.mubr.f32.gmra.mxu0 %v196
    %v198 = vpop.f32.mrf.mxu0
    %v199 = vadd.f32 0.0, %v198
    %v200 = vpop.f32.mrf.mxu0
    %201 = vmatprep.mubr.f32.mxu0 0.0
    %v202 = vand.u32 %v80, 4294901760
    %v203 = vsub.f32 %v80, %v202
    %v204 = vand.u32 %v203, 4294901760
    %v205 = vsub.f32 %v203, %v204
    %v206 = vand.u32 %v205, 4294901760
    %207 = vmatmul.mubr.f32.gmra.mxu0 %v206
    %v208 = vpop.f32.mrf.mxu0
    %v209 = vadd.f32 0.0, %v208
    %v210 = vpop.f32.mrf.mxu0
    %211 = vmatprep.mubr.f32.mxu0 0.0
    %v212 = vand.u32 %v81, 4294901760
    %v213 = vsub.f32 %v81, %v212
    %v214 = vand.u32 %v213, 4294901760
    %v215 = vsub.f32 %v213, %v214
    %v216 = vand.u32 %v215, 4294901760
    %217 = vmatmul.mubr.f32.gmra.mxu0 %v216
    %v218 = vpop.f32.mrf.mxu0
    %v219 = vadd.f32 0.0, %v218
    %v220 = vpop.f32.mrf.mxu0
    %221 = vmatprep.mubr.f32.mxu0 0.0
    %v222 = vand.u32 %v82, 4294901760
    %v223 = vsub.f32 %v82, %v222
    %v224 = vand.u32 %v223, 4294901760
    %v225 = vsub.f32 %v223, %v224
    %v226 = vand.u32 %v225, 4294901760
    %227 = vmatmul.mubr.f32.gmra.mxu0 %v226
    %v228 = vpop.f32.mrf.mxu0
    %v229 = vadd.f32 0.0, %v228
    %v230 = vpop.f32.mrf.mxu0
    %231 = vmatprep.mubr.f32.mxu0 0.0
    %v232 = vand.u32 %v83, 4294901760
    %v233 = vsub.f32 %v83, %v232
    %v234 = vand.u32 %v233, 4294901760
    %v235 = vsub.f32 %v233, %v234
    %v236 = vand.u32 %v235, 4294901760
    %237 = vmatmul.mubr.f32.gmra.mxu0 %v236
    %v238 = vpop.f32.mrf.mxu0
    %v239 = vadd.f32 0.0, %v238
    %v240 = vpop.f32.mrf.mxu0
    %241 = vmatprep.mubr.f32.mxu0 0.0
    %v242 = vand.u32 %v84, 4294901760
    %v243 = vsub.f32 %v84, %v242
    %v244 = vand.u32 %v243, 4294901760
    %v245 = vsub.f32 %v243, %v244
    %v246 = vand.u32 %v245, 4294901760
    %247 = vmatmul.mubr.f32.gmra.mxu0 %v246
    %v248 = vpop.f32.mrf.mxu0
    %v249 = vadd.f32 0.0, %v248
    %v250 = vpop.f32.mrf.mxu0
    %251 = vmatprep.mubr.f32.mxu0 0.0
    %v252 = vand.u32 %v85, 4294901760
    %v253 = vsub.f32 %v85, %v252
    %v254 = vand.u32 %v253, 4294901760
    %v255 = vsub.f32 %v253, %v254
    %v256 = vand.u32 %v255, 4294901760
    %257 = vmatmul.mubr.f32.gmra.mxu0 %v256
    %v258 = vpop.f32.mrf.mxu0
    %v259 = vadd.f32 0.0, %v258
    %v260 = vpop.f32.mrf.mxu0
    %261 = vmatprep.mubr.f32.mxu0 0.0
    %v262 = vand.u32 %v86, 4294901760
    %v263 = vsub.f32 %v86, %v262
    %v264 = vand.u32 %v263, 4294901760
    %v265 = vsub.f32 %v263, %v264
    %v266 = vand.u32 %v265, 4294901760
    %267 = vmatmul.mubr.f32.gmra.mxu0 %v266
    %v268 = vpop.f32.mrf.mxu0
    %v269 = vadd.f32 0.0, %v268
    %v270 = vpop.f32.mrf.mxu0
    %271 = vmatprep.mubr.f32.mxu0 0.0
    %v272 = vand.u32 %v87, 4294901760
    %v273 = vsub.f32 %v87, %v272
    %v274 = vand.u32 %v273, 4294901760
    %v275 = vsub.f32 %v273, %v274
    %v276 = vand.u32 %v275, 4294901760
    %277 = vmatmul.mubr.f32.gmra.mxu0 %v276
    %v278 = vpop.f32.mrf.mxu0
    %v279 = vadd.f32 0.0, %v278
    %v280 = vpop.f32.mrf.mxu0
    %281 = vmatprep.mubr.f32.mxu0 0.0
    %v282 = vand.u32 %v88, 4294901760
    %v283 = vsub.f32 %v88, %v282
    %v284 = vand.u32 %v283, 4294901760
    %v285 = vsub.f32 %v283, %v284
    %v286 = vand.u32 %v285, 4294901760
    %287 = vmatmul.mubr.f32.gmra.mxu0 %v286
    %v288 = vpop.f32.mrf.mxu0
    %v289 = vadd.f32 0.0, %v288
    %v290 = vpop.f32.mrf.mxu0
    %291 = vmatprep.mubr.f32.mxu0 0.0
    %v292 = vand.u32 %v89, 4294901760
    %v293 = vsub.f32 %v89, %v292
    %v294 = vand.u32 %v293, 4294901760
    %v295 = vsub.f32 %v293, %v294
    %v296 = vand.u32 %v295, 4294901760
    %297 = vmatmul.mubr.f32.gmra.mxu0 %v296
    %v298 = vpop.f32.mrf.mxu0
    %v299 = vadd.f32 0.0, %v298
    %v300 = vpop.f32.mrf.mxu0
    %301 = vmatprep.mubr.f32.mxu0 0.0
    %v302 = vand.u32 %v90, 4294901760
    %v303 = vsub.f32 %v90, %v302
    %v304 = vand.u32 %v303, 4294901760
    %v305 = vsub.f32 %v303, %v304
    %v306 = vand.u32 %v305, 4294901760
    %307 = vmatmul.mubr.f32.gmra.mxu0 %v306
    %v308 = vpop.f32.mrf.mxu0
    %v309 = vadd.f32 0.0, %v308
    %v310 = vpop.f32.mrf.mxu0
    %311 = vmatprep.mubr.f32.mxu0 0.0
    %v312 = vand.u32 %v91, 4294901760
    %v313 = vsub.f32 %v91, %v312
    %v314 = vand.u32 %v313, 4294901760
    %v315 = vsub.f32 %v313, %v314
    %v316 = vand.u32 %v315, 4294901760
    %317 = vmatmul.mubr.f32.gmra.mxu0 %v316
    %v318 = vpop.f32.mrf.mxu0
    %v319 = vadd.f32 0.0, %v318
    %v320 = vpop.f32.mrf.mxu0
    %321 = vmatprep.mubr.f32.mxu0 0.0
    %v322 = vand.u32 %v92, 4294901760
    %v323 = vsub.f32 %v92, %v322
    %v324 = vand.u32 %v323, 4294901760
    %v325 = vsub.f32 %v323, %v324
    %v326 = vand.u32 %v325, 4294901760
    %327 = vmatmul.mubr.f32.gmra.mxu0 %v326
    %v328 = vpop.f32.mrf.mxu0
    %v329 = vadd.f32 0.0, %v328
    %v330 = vpop.f32.mrf.mxu0
    %331 = vmatprep.mubr.f32.mxu0 0.0
    %v332 = vand.u32 %v93, 4294901760
    %v333 = vsub.f32 %v93, %v332
    %v334 = vand.u32 %v333, 4294901760
    %v335 = vsub.f32 %v333, %v334
    %v336 = vand.u32 %v335, 4294901760
    %337 = vmatmul.mubr.f32.gmra.mxu0 %v336
    %v338 = vpop.f32.mrf.mxu0
    %v339 = vadd.f32 0.0, %v338
    %v340 = vpop.f32.mrf.mxu0
    %341 = vmatprep.mubr.f32.mxu0 0.0
    %v342 = vand.u32 %v94, 4294901760
    %v343 = vsub.f32 %v94, %v342
    %v344 = vand.u32 %v343, 4294901760
    %v345 = vsub.f32 %v343, %v344
    %v346 = vand.u32 %v345, 4294901760
    %347 = vmatmul.mubr.f32.gmra.mxu0 %v346
    %v348 = vpop.f32.mrf.mxu0
    %v349 = vadd.f32 0.0, %v348
    %v350 = vpop.f32.mrf.mxu0
    %351 = vdwg.mxu0
    %352 = vmatprep.subr.mxu0 0.0
    %v353 = vand.u32 %v110, 4294901760
    %v354 = vsub.f32 %v110, %v353
    %v355 = vand.u32 %v354, 4294901760
    %v356 = vsub.f32 %v354, %v355
    %v357 = vand.u32 %v356, 4294901760
    %358 = vmatpush1.msra.mxu0 %v357
    %359 = vmatprep.subr.mxu0 0.0
    %v360 = vand.u32 %v109, 4294901760
    %v361 = vsub.f32 %v109, %v360
    %v362 = vand.u32 %v361, 4294901760
    %v363 = vsub.f32 %v361, %v362
    %v364 = vand.u32 %v363, 4294901760
    %365 = vmatpush1.msra.mxu0 %v364
    %366 = vmatprep.subr.mxu0 0.0
    %v367 = vand.u32 %v108, 4294901760
    %v368 = vsub.f32 %v108, %v367
    %v369 = vand.u32 %v368, 4294901760
    %v370 = vsub.f32 %v368, %v369
    %v371 = vand.u32 %v370, 4294901760
    %372 = vmatpush1.msra.mxu0 %v371
    %373 = vmatprep.subr.mxu0 0.0
    %v374 = vand.u32 %v107, 4294901760
    %v375 = vsub.f32 %v107, %v374
    %v376 = vand.u32 %v375, 4294901760
    %v377 = vsub.f32 %v375, %v376
    %v378 = vand.u32 %v377, 4294901760
    %379 = vmatpush1.msra.mxu0 %v378
    %380 = vmatprep.subr.mxu0 0.0
    %v381 = vand.u32 %v106, 4294901760
    %v382 = vsub.f32 %v106, %v381
    %v383 = vand.u32 %v382, 4294901760
    %v384 = vsub.f32 %v382, %v383
    %v385 = vand.u32 %v384, 4294901760
    %386 = vmatpush1.msra.mxu0 %v385
    %387 = vmatprep.subr.mxu0 0.0
    %v388 = vand.u32 %v105, 4294901760
    %v389 = vsub.f32 %v105, %v388
    %v390 = vand.u32 %v389, 4294901760
    %v391 = vsub.f32 %v389, %v390
    %v392 = vand.u32 %v391, 4294901760
    %393 = vmatpush1.msra.mxu0 %v392
    %394 = vmatprep.subr.mxu0 0.0
    %v395 = vand.u32 %v104, 4294901760
    %v396 = vsub.f32 %v104, %v395
    %v397 = vand.u32 %v396, 4294901760
    %v398 = vsub.f32 %v396, %v397
    %v399 = vand.u32 %v398, 4294901760
    %400 = vmatpush1.msra.mxu0 %v399
    %401 = vmatprep.subr.mxu0 0.0
    %v402 = vand.u32 %v103, 4294901760
    %v403 = vsub.f32 %v103, %v402
    %v404 = vand.u32 %v403, 4294901760
    %v405 = vsub.f32 %v403, %v404
    %v406 = vand.u32 %v405, 4294901760
    %407 = vmatpush1.msra.mxu0 %v406
    %408 = vmatprep.subr.mxu0 0.0
    %v409 = vand.u32 %v102, 4294901760
    %v410 = vsub.f32 %v102, %v409
    %v411 = vand.u32 %v410, 4294901760
    %v412 = vsub.f32 %v410, %v411
    %v413 = vand.u32 %v412, 4294901760
    %414 = vmatpush1.msra.mxu0 %v413
    %415 = vmatprep.subr.mxu0 0.0
    %v416 = vand.u32 %v101, 4294901760
    %v417 = vsub.f32 %v101, %v416
    %v418 = vand.u32 %v417, 4294901760
    %v419 = vsub.f32 %v417, %v418
    %v420 = vand.u32 %v419, 4294901760
    %421 = vmatpush1.msra.mxu0 %v420
    %422 = vmatprep.subr.mxu0 0.0
    %v423 = vand.u32 %v100, 4294901760
    %v424 = vsub.f32 %v100, %v423
    %v425 = vand.u32 %v424, 4294901760
    %v426 = vsub.f32 %v424, %v425
    %v427 = vand.u32 %v426, 4294901760
    %428 = vmatpush1.msra.mxu0 %v427
    %429 = vmatprep.subr.mxu0 0.0
    %v430 = vand.u32 %v99, 4294901760
    %v431 = vsub.f32 %v99, %v430
    %v432 = vand.u32 %v431, 4294901760
    %v433 = vsub.f32 %v431, %v432
    %v434 = vand.u32 %v433, 4294901760
    %435 = vmatpush1.msra.mxu0 %v434
    %436 = vmatprep.subr.mxu0 0.0
    %v437 = vand.u32 %v98, 4294901760
    %v438 = vsub.f32 %v98, %v437
    %v439 = vand.u32 %v438, 4294901760
    %v440 = vsub.f32 %v438, %v439
    %v441 = vand.u32 %v440, 4294901760
    %442 = vmatpush1.msra.mxu0 %v441
    %443 = vmatprep.subr.mxu0 0.0
    %v444 = vand.u32 %v97, 4294901760
    %v445 = vsub.f32 %v97, %v444
    %v446 = vand.u32 %v445, 4294901760
    %v447 = vsub.f32 %v445, %v446
    %v448 = vand.u32 %v447, 4294901760
    %449 = vmatpush1.msra.mxu0 %v448
    %450 = vmatprep.subr.mxu0 0.0
    %v451 = vand.u32 %v96, 4294901760
    %v452 = vsub.f32 %v96, %v451
    %v453 = vand.u32 %v452, 4294901760
    %v454 = vsub.f32 %v452, %v453
    %v455 = vand.u32 %v454, 4294901760
    %456 = vmatpush1.msra.mxu0 %v455
    %457 = vmatprep.subr.mxu0 0.0
    %v458 = vand.u32 %v95, 4294901760
    %v459 = vsub.f32 %v95, %v458
    %v460 = vand.u32 %v459, 4294901760
    %v461 = vsub.f32 %v459, %v460
    %v462 = vand.u32 %v461, 4294901760
    %463 = vmatpush1.msra.mxu0 %v462
    %464 = vmatprep.subr.mxu0 0.0
    %465 = vmatpush2.msra.mxu0 0.0
    %466 = vmatprep.subr.mxu0 0.0
    %467 = vmatpush2.msra.mxu0 0.0
    %468 = vmatprep.subr.mxu0 0.0
    %469 = vmatpush2.msra.mxu0 0.0
    %470 = vmatprep.subr.mxu0 0.0
    %471 = vmatpush2.msra.mxu0 0.0
    %472 = vmatprep.subr.mxu0 0.0
    %473 = vmatpush2.msra.mxu0 0.0
    %474 = vmatprep.subr.mxu0 0.0
    %475 = vmatpush2.msra.mxu0 0.0
    %476 = vmatprep.subr.mxu0 0.0
    %477 = vmatpush2.msra.mxu0 0.0
    %478 = vmatprep.subr.mxu0 0.0
    %479 = vmatpush2.msra.mxu0 0.0
    %480 = vmatprep.subr.mxu0 0.0
    %481 = vmatpush2.msra.mxu0 0.0
    %482 = vmatprep.subr.mxu0 0.0
    %483 = vmatpush2.msra.mxu0 0.0
    %484 = vmatprep.subr.mxu0 0.0
    %485 = vmatpush2.msra.mxu0 0.0
    %486 = vmatprep.subr.mxu0 0.0
    %487 = vmatpush2.msra.mxu0 0.0
    %488 = vmatprep.subr.mxu0 0.0
    %489 = vmatpush2.msra.mxu0 0.0
    %490 = vmatprep.subr.mxu0 0.0
    %491 = vmatpush2.msra.mxu0 0.0
    %492 = vmatprep.subr.mxu0 0.0
    %493 = vmatpush2.msra.mxu0 0.0
    %494 = vmatprep.subr.mxu0 0.0
    %495 = vmatpush2.msra.mxu0 0.0
    %496 = vmatprep.mubr.f32.mxu0 0.0
    %v497 = vand.u32 %v79, 4294901760
    %498 = vmatmul.mubr.f32.gmra.mxu0 %v497
    %v499 = vpop.f32.mrf.mxu0
    %v500 = vadd.f32 %v199, %v499
    %v501 = vpop.f32.mrf.mxu0
    %502 = vmatprep.mubr.f32.mxu0 0.0
    %v503 = vand.u32 %v80, 4294901760
    %504 = vmatmul.mubr.f32.gmra.mxu0 %v503
    %v505 = vpop.f32.mrf.mxu0
    %v506 = vadd.f32 %v209, %v505
    %v507 = vpop.f32.mrf.mxu0
    %508 = vmatprep.mubr.f32.mxu0 0.0
    %v509 = vand.u32 %v81, 4294901760
    %510 = vmatmul.mubr.f32.gmra.mxu0 %v509
    %v511 = vpop.f32.mrf.mxu0
    %v512 = vadd.f32 %v219, %v511
    %v513 = vpop.f32.mrf.mxu0
    %514 = vmatprep.mubr.f32.mxu0 0.0
    %v515 = vand.u32 %v82, 4294901760
    %516 = vmatmul.mubr.f32.gmra.mxu0 %v515
    %v517 = vpop.f32.mrf.mxu0
    %v518 = vadd.f32 %v229, %v517
    %v519 = vpop.f32.mrf.mxu0
    %520 = vmatprep.mubr.f32.mxu0 0.0
    %v521 = vand.u32 %v83, 4294901760
    %522 = vmatmul.mubr.f32.gmra.mxu0 %v521
    %v523 = vpop.f32.mrf.mxu0
    %v524 = vadd.f32 %v239, %v523
    %v525 = vpop.f32.mrf.mxu0
    %526 = vmatprep.mubr.f32.mxu0 0.0
    %v527 = vand.u32 %v84, 4294901760
    %528 = vmatmul.mubr.f32.gmra.mxu0 %v527
    %v529 = vpop.f32.mrf.mxu0
    %v530 = vadd.f32 %v249, %v529
    %v531 = vpop.f32.mrf.mxu0
    %532 = vmatprep.mubr.f32.mxu0 0.0
    %v533 = vand.u32 %v85, 4294901760
    %534 = vmatmul.mubr.f32.gmra.mxu0 %v533
    %v535 = vpop.f32.mrf.mxu0
    %v536 = vadd.f32 %v259, %v535
    %v537 = vpop.f32.mrf.mxu0
    %538 = vmatprep.mubr.f32.mxu0 0.0
    %v539 = vand.u32 %v86, 4294901760
    %540 = vmatmul.mubr.f32.gmra.mxu0 %v539
    %v541 = vpop.f32.mrf.mxu0
    %v542 = vadd.f32 %v269, %v541
    %v543 = vpop.f32.mrf.mxu0
    %544 = vmatprep.mubr.f32.mxu0 0.0
    %v545 = vand.u32 %v87, 4294901760
    %546 = vmatmul.mubr.f32.gmra.mxu0 %v545
    %v547 = vpop.f32.mrf.mxu0
    %v548 = vadd.f32 %v279, %v547
    %v549 = vpop.f32.mrf.mxu0
    %550 = vmatprep.mubr.f32.mxu0 0.0
    %v551 = vand.u32 %v88, 4294901760
    %552 = vmatmul.mubr.f32.gmra.mxu0 %v551
    %v553 = vpop.f32.mrf.mxu0
    %v554 = vadd.f32 %v289, %v553
    %v555 = vpop.f32.mrf.mxu0
    %556 = vmatprep.mubr.f32.mxu0 0.0
    %v557 = vand.u32 %v89, 4294901760
    %558 = vmatmul.mubr.f32.gmra.mxu0 %v557
    %v559 = vpop.f32.mrf.mxu0
    %v560 = vadd.f32 %v299, %v559
    %v561 = vpop.f32.mrf.mxu0
    %562 = vmatprep.mubr.f32.mxu0 0.0
    %v563 = vand.u32 %v90, 4294901760
    %564 = vmatmul.mubr.f32.gmra.mxu0 %v563
    %v565 = vpop.f32.mrf.mxu0
    %v566 = vadd.f32 %v309, %v565
    %v567 = vpop.f32.mrf.mxu0
    %568 = vmatprep.mubr.f32.mxu0 0.0
    %v569 = vand.u32 %v91, 4294901760
    %570 = vmatmul.mubr.f32.gmra.mxu0 %v569
    %v571 = vpop.f32.mrf.mxu0
    %v572 = vadd.f32 %v319, %v571
    %v573 = vpop.f32.mrf.mxu0
    %574 = vmatprep.mubr.f32.mxu0 0.0
    %v575 = vand.u32 %v92, 4294901760
    %576 = vmatmul.mubr.f32.gmra.mxu0 %v575
    %v577 = vpop.f32.mrf.mxu0
    %v578 = vadd.f32 %v329, %v577
    %v579 = vpop.f32.mrf.mxu0
    %580 = vmatprep.mubr.f32.mxu0 0.0
    %v581 = vand.u32 %v93, 4294901760
    %582 = vmatmul.mubr.f32.gmra.mxu0 %v581
    %v583 = vpop.f32.mrf.mxu0
    %v584 = vadd.f32 %v339, %v583
    %v585 = vpop.f32.mrf.mxu0
    %586 = vmatprep.mubr.f32.mxu0 0.0
    %v587 = vand.u32 %v94, 4294901760
    %588 = vmatmul.mubr.f32.gmra.mxu0 %v587
    %v589 = vpop.f32.mrf.mxu0
    %v590 = vadd.f32 %v349, %v589
    %v591 = vpop.f32.mrf.mxu0
    %592 = vdwg.mxu0
    %593 = vmatprep.subr.mxu0 0.0
    %v594 = vand.u32 %v110, 4294901760
    %v595 = vsub.f32 %v110, %v594
    %596 = vmatpush1.msra.mxu0 %v595
    %597 = vmatprep.subr.mxu0 0.0
    %v598 = vand.u32 %v109, 4294901760
    %v599 = vsub.f32 %v109, %v598
    %600 = vmatpush1.msra.mxu0 %v599
    %601 = vmatprep.subr.mxu0 0.0
    %v602 = vand.u32 %v108, 4294901760
    %v603 = vsub.f32 %v108, %v602
    %604 = vmatpush1.msra.mxu0 %v603
    %605 = vmatprep.subr.mxu0 0.0
    %v606 = vand.u32 %v107, 4294901760
    %v607 = vsub.f32 %v107, %v606
    %608 = vmatpush1.msra.mxu0 %v607
    %609 = vmatprep.subr.mxu0 0.0
    %v610 = vand.u32 %v106, 4294901760
    %v611 = vsub.f32 %v106, %v610
    %612 = vmatpush1.msra.mxu0 %v611
    %613 = vmatprep.subr.mxu0 0.0
    %v614 = vand.u32 %v105, 4294901760
    %v615 = vsub.f32 %v105, %v614
    %616 = vmatpush1.msra.mxu0 %v615
    %617 = vmatprep.subr.mxu0 0.0
    %v618 = vand.u32 %v104, 4294901760
    %v619 = vsub.f32 %v104, %v618
    %620 = vmatpush1.msra.mxu0 %v619
    %621 = vmatprep.subr.mxu0 0.0
    %v622 = vand.u32 %v103, 4294901760
    %v623 = vsub.f32 %v103, %v622
    %624 = vmatpush1.msra.mxu0 %v623
    %625 = vmatprep.subr.mxu0 0.0
    %v626 = vand.u32 %v102, 4294901760
    %v627 = vsub.f32 %v102, %v626
    %628 = vmatpush1.msra.mxu0 %v627
    %629 = vmatprep.subr.mxu0 0.0
    %v630 = vand.u32 %v101, 4294901760
    %v631 = vsub.f32 %v101, %v630
    %632 = vmatpush1.msra.mxu0 %v631
    %633 = vmatprep.subr.mxu0 0.0
    %v634 = vand.u32 %v100, 4294901760
    %v635 = vsub.f32 %v100, %v634
    %636 = vmatpush1.msra.mxu0 %v635
    %637 = vmatprep.subr.mxu0 0.0
    %v638 = vand.u32 %v99, 4294901760
    %v639 = vsub.f32 %v99, %v638
    %640 = vmatpush1.msra.mxu0 %v639
    %641 = vmatprep.subr.mxu0 0.0
    %v642 = vand.u32 %v98, 4294901760
    %v643 = vsub.f32 %v98, %v642
    %644 = vmatpush1.msra.mxu0 %v643
    %645 = vmatprep.subr.mxu0 0.0
    %v646 = vand.u32 %v97, 4294901760
    %v647 = vsub.f32 %v97, %v646
    %648 = vmatpush1.msra.mxu0 %v647
    %649 = vmatprep.subr.mxu0 0.0
    %v650 = vand.u32 %v96, 4294901760
    %v651 = vsub.f32 %v96, %v650
    %652 = vmatpush1.msra.mxu0 %v651
    %653 = vmatprep.subr.mxu0 0.0
    %v654 = vand.u32 %v95, 4294901760
    %v655 = vsub.f32 %v95, %v654
    %656 = vmatpush1.msra.mxu0 %v655
    %657 = vmatprep.subr.mxu0 0.0
    %658 = vmatpush2.msra.mxu0 0.0
    %659 = vmatprep.subr.mxu0 0.0
    %660 = vmatpush2.msra.mxu0 0.0
    %661 = vmatprep.subr.mxu0 0.0
    %662 = vmatpush2.msra.mxu0 0.0
    %663 = vmatprep.subr.mxu0 0.0
    %664 = vmatpush2.msra.mxu0 0.0
    %665 = vmatprep.subr.mxu0 0.0
    %666 = vmatpush2.msra.mxu0 0.0
    %667 = vmatprep.subr.mxu0 0.0
    %668 = vmatpush2.msra.mxu0 0.0
    %669 = vmatprep.subr.mxu0 0.0
    %670 = vmatpush2.msra.mxu0 0.0
    %671 = vmatprep.subr.mxu0 0.0
    %672 = vmatpush2.msra.mxu0 0.0
    %673 = vmatprep.subr.mxu0 0.0
    %674 = vmatpush2.msra.mxu0 0.0
    %675 = vmatprep.subr.mxu0 0.0
    %676 = vmatpush2.msra.mxu0 0.0
    %677 = vmatprep.subr.mxu0 0.0
    %678 = vmatpush2.msra.mxu0 0.0
    %679 = vmatprep.subr.mxu0 0.0
    %680 = vmatpush2.msra.mxu0 0.0
    %681 = vmatprep.subr.mxu0 0.0
    %682 = vmatpush2.msra.mxu0 0.0
    %683 = vmatprep.subr.mxu0 0.0
    %684 = vmatpush2.msra.mxu0 0.0
    %685 = vmatprep.subr.mxu0 0.0
    %686 = vmatpush2.msra.mxu0 0.0
    %687 = vmatprep.subr.mxu0 0.0
    %688 = vmatpush2.msra.mxu0 0.0
    %689 = vmatprep.mubr.f32.mxu0 0.0
    %v690 = vand.u32 %v79, 4294901760
    %v691 = vsub.f32 %v79, %v690
    %692 = vmatmul.mubr.f32.gmra.mxu0 %v691
    %v693 = vpop.f32.mrf.mxu0
    %v694 = vadd.f32 %v500, %v693
    %v695 = vpop.f32.mrf.mxu0
    %696 = vmatprep.mubr.f32.mxu0 0.0
    %v697 = vand.u32 %v80, 4294901760
    %v698 = vsub.f32 %v80, %v697
    %699 = vmatmul.mubr.f32.gmra.mxu0 %v698
    %v700 = vpop.f32.mrf.mxu0
    %v701 = vadd.f32 %v506, %v700
    %v702 = vpop.f32.mrf.mxu0
    %703 = vmatprep.mubr.f32.mxu0 0.0
    %v704 = vand.u32 %v81, 4294901760
    %v705 = vsub.f32 %v81, %v704
    %706 = vmatmul.mubr.f32.gmra.mxu0 %v705
    %v707 = vpop.f32.mrf.mxu0
    %v708 = vadd.f32 %v512, %v707
    %v709 = vpop.f32.mrf.mxu0
    %710 = vmatprep.mubr.f32.mxu0 0.0
    %v711 = vand.u32 %v82, 4294901760
    %v712 = vsub.f32 %v82, %v711
    %713 = vmatmul.mubr.f32.gmra.mxu0 %v712
    %v714 = vpop.f32.mrf.mxu0
    %v715 = vadd.f32 %v518, %v714
    %v716 = vpop.f32.mrf.mxu0
    %717 = vmatprep.mubr.f32.mxu0 0.0
    %v718 = vand.u32 %v83, 4294901760
    %v719 = vsub.f32 %v83, %v718
    %720 = vmatmul.mubr.f32.gmra.mxu0 %v719
    %v721 = vpop.f32.mrf.mxu0
    %v722 = vadd.f32 %v524, %v721
    %v723 = vpop.f32.mrf.mxu0
    %724 = vmatprep.mubr.f32.mxu0 0.0
    %v725 = vand.u32 %v84, 4294901760
    %v726 = vsub.f32 %v84, %v725
    %727 = vmatmul.mubr.f32.gmra.mxu0 %v726
    %v728 = vpop.f32.mrf.mxu0
    %v729 = vadd.f32 %v530, %v728
    %v730 = vpop.f32.mrf.mxu0
    %731 = vmatprep.mubr.f32.mxu0 0.0
    %v732 = vand.u32 %v85, 4294901760
    %v733 = vsub.f32 %v85, %v732
    %734 = vmatmul.mubr.f32.gmra.mxu0 %v733
    %v735 = vpop.f32.mrf.mxu0
    %v736 = vadd.f32 %v536, %v735
    %v737 = vpop.f32.mrf.mxu0
    %738 = vmatprep.mubr.f32.mxu0 0.0
    %v739 = vand.u32 %v86, 4294901760
    %v740 = vsub.f32 %v86, %v739
    %741 = vmatmul.mubr.f32.gmra.mxu0 %v740
    %v742 = vpop.f32.mrf.mxu0
    %v743 = vadd.f32 %v542, %v742
    %v744 = vpop.f32.mrf.mxu0
    %745 = vmatprep.mubr.f32.mxu0 0.0
    %v746 = vand.u32 %v87, 4294901760
    %v747 = vsub.f32 %v87, %v746
    %748 = vmatmul.mubr.f32.gmra.mxu0 %v747
    %v749 = vpop.f32.mrf.mxu0
    %v750 = vadd.f32 %v548, %v749
    %v751 = vpop.f32.mrf.mxu0
    %752 = vmatprep.mubr.f32.mxu0 0.0
    %v753 = vand.u32 %v88, 4294901760
    %v754 = vsub.f32 %v88, %v753
    %755 = vmatmul.mubr.f32.gmra.mxu0 %v754
    %v756 = vpop.f32.mrf.mxu0
    %v757 = vadd.f32 %v554, %v756
    %v758 = vpop.f32.mrf.mxu0
    %759 = vmatprep.mubr.f32.mxu0 0.0
    %v760 = vand.u32 %v89, 4294901760
    %v761 = vsub.f32 %v89, %v760
    %762 = vmatmul.mubr.f32.gmra.mxu0 %v761
    %v763 = vpop.f32.mrf.mxu0
    %v764 = vadd.f32 %v560, %v763
    %v765 = vpop.f32.mrf.mxu0
    %766 = vmatprep.mubr.f32.mxu0 0.0
    %v767 = vand.u32 %v90, 4294901760
    %v768 = vsub.f32 %v90, %v767
    %769 = vmatmul.mubr.f32.gmra.mxu0 %v768
    %v770 = vpop.f32.mrf.mxu0
    %v771 = vadd.f32 %v566, %v770
    %v772 = vpop.f32.mrf.mxu0
    %773 = vmatprep.mubr.f32.mxu0 0.0
    %v774 = vand.u32 %v91, 4294901760
    %v775 = vsub.f32 %v91, %v774
    %776 = vmatmul.mubr.f32.gmra.mxu0 %v775
    %v777 = vpop.f32.mrf.mxu0
    %v778 = vadd.f32 %v572, %v777
    %v779 = vpop.f32.mrf.mxu0
    %780 = vmatprep.mubr.f32.mxu0 0.0
    %v781 = vand.u32 %v92, 4294901760
    %v782 = vsub.f32 %v92, %v781
    %783 = vmatmul.mubr.f32.gmra.mxu0 %v782
    %v784 = vpop.f32.mrf.mxu0
    %v785 = vadd.f32 %v578, %v784
    %v786 = vpop.f32.mrf.mxu0
    %787 = vmatprep.mubr.f32.mxu0 0.0
    %v788 = vand.u32 %v93, 4294901760
    %v789 = vsub.f32 %v93, %v788
    %790 = vmatmul.mubr.f32.gmra.mxu0 %v789
    %v791 = vpop.f32.mrf.mxu0
    %v792 = vadd.f32 %v584, %v791
    %v793 = vpop.f32.mrf.mxu0
    %794 = vmatprep.mubr.f32.mxu0 0.0
    %v795 = vand.u32 %v94, 4294901760
    %v796 = vsub.f32 %v94, %v795
    %797 = vmatmul.mubr.f32.gmra.mxu0 %v796
    %v798 = vpop.f32.mrf.mxu0
    %v799 = vadd.f32 %v590, %v798
    %v800 = vpop.f32.mrf.mxu0
    %801 = vdwg.mxu0
    %802 = vmatprep.subr.mxu0 0.0
    %v803 = vand.u32 %v110, 4294901760
    %804 = vmatpush1.msra.mxu0 %v803
    %805 = vmatprep.subr.mxu0 0.0
    %v806 = vand.u32 %v109, 4294901760
    %807 = vmatpush1.msra.mxu0 %v806
    %808 = vmatprep.subr.mxu0 0.0
    %v809 = vand.u32 %v108, 4294901760
    %810 = vmatpush1.msra.mxu0 %v809
    %811 = vmatprep.subr.mxu0 0.0
    %v812 = vand.u32 %v107, 4294901760
    %813 = vmatpush1.msra.mxu0 %v812
    %814 = vmatprep.subr.mxu0 0.0
    %v815 = vand.u32 %v106, 4294901760
    %816 = vmatpush1.msra.mxu0 %v815
    %817 = vmatprep.subr.mxu0 0.0
    %v818 = vand.u32 %v105, 4294901760
    %819 = vmatpush1.msra.mxu0 %v818
    %820 = vmatprep.subr.mxu0 0.0
    %v821 = vand.u32 %v104, 4294901760
    %822 = vmatpush1.msra.mxu0 %v821
    %823 = vmatprep.subr.mxu0 0.0
    %v824 = vand.u32 %v103, 4294901760
    %825 = vmatpush1.msra.mxu0 %v824
    %826 = vmatprep.subr.mxu0 0.0
    %v827 = vand.u32 %v102, 4294901760
    %828 = vmatpush1.msra.mxu0 %v827
    %829 = vmatprep.subr.mxu0 0.0
    %v830 = vand.u32 %v101, 4294901760
    %831 = vmatpush1.msra.mxu0 %v830
    %832 = vmatprep.subr.mxu0 0.0
    %v833 = vand.u32 %v100, 4294901760
    %834 = vmatpush1.msra.mxu0 %v833
    %835 = vmatprep.subr.mxu0 0.0
    %v836 = vand.u32 %v99, 4294901760
    %837 = vmatpush1.msra.mxu0 %v836
    %838 = vmatprep.subr.mxu0 0.0
    %v839 = vand.u32 %v98, 4294901760
    %840 = vmatpush1.msra.mxu0 %v839
    %841 = vmatprep.subr.mxu0 0.0
    %v842 = vand.u32 %v97, 4294901760
    %843 = vmatpush1.msra.mxu0 %v842
    %844 = vmatprep.subr.mxu0 0.0
    %v845 = vand.u32 %v96, 4294901760
    %846 = vmatpush1.msra.mxu0 %v845
    %847 = vmatprep.subr.mxu0 0.0
    %v848 = vand.u32 %v95, 4294901760
    %849 = vmatpush1.msra.mxu0 %v848
    %850 = vmatprep.subr.mxu0 0.0
    %851 = vmatpush2.msra.mxu0 0.0
    %852 = vmatprep.subr.mxu0 0.0
    %853 = vmatpush2.msra.mxu0 0.0
    %854 = vmatprep.subr.mxu0 0.0
    %855 = vmatpush2.msra.mxu0 0.0
    %856 = vmatprep.subr.mxu0 0.0
    %857 = vmatpush2.msra.mxu0 0.0
    %858 = vmatprep.subr.mxu0 0.0
    %859 = vmatpush2.msra.mxu0 0.0
    %860 = vmatprep.subr.mxu0 0.0
    %861 = vmatpush2.msra.mxu0 0.0
    %862 = vmatprep.subr.mxu0 0.0
    %863 = vmatpush2.msra.mxu0 0.0
    %864 = vmatprep.subr.mxu0 0.0
    %865 = vmatpush2.msra.mxu0 0.0
    %866 = vmatprep.subr.mxu0 0.0
    %867 = vmatpush2.msra.mxu0 0.0
    %868 = vmatprep.subr.mxu0 0.0
    %869 = vmatpush2.msra.mxu0 0.0
    %870 = vmatprep.subr.mxu0 0.0
    %871 = vmatpush2.msra.mxu0 0.0
    %872 = vmatprep.subr.mxu0 0.0
    %873 = vmatpush2.msra.mxu0 0.0
    %874 = vmatprep.subr.mxu0 0.0
    %875 = vmatpush2.msra.mxu0 0.0
    %876 = vmatprep.subr.mxu0 0.0
    %877 = vmatpush2.msra.mxu0 0.0
    %878 = vmatprep.subr.mxu0 0.0
    %879 = vmatpush2.msra.mxu0 0.0
    %880 = vmatprep.subr.mxu0 0.0
    %881 = vmatpush2.msra.mxu0 0.0
    %882 = vmatprep.mubr.f32.mxu0 0.0
    %v883 = vand.u32 %v79, 4294901760
    %v884 = vsub.f32 %v79, %v883
    %v885 = vand.u32 %v884, 4294901760
    %886 = vmatmul.mubr.f32.gmra.mxu0 %v885
    %v887 = vpop.f32.mrf.mxu0
    %v888 = vadd.f32 %v694, %v887
    %v889 = vpop.f32.mrf.mxu0
    %890 = vmatprep.mubr.f32.mxu0 0.0
    %v891 = vand.u32 %v80, 4294901760
    %v892 = vsub.f32 %v80, %v891
    %v893 = vand.u32 %v892, 4294901760
    %894 = vmatmul.mubr.f32.gmra.mxu0 %v893
    %v895 = vpop.f32.mrf.mxu0
    %v896 = vadd.f32 %v701, %v895
    %v897 = vpop.f32.mrf.mxu0
    %898 = vmatprep.mubr.f32.mxu0 0.0
    %v899 = vand.u32 %v81, 4294901760
    %v900 = vsub.f32 %v81, %v899
    %v901 = vand.u32 %v900, 4294901760
    %902 = vmatmul.mubr.f32.gmra.mxu0 %v901
    %v903 = vpop.f32.mrf.mxu0
    %v904 = vadd.f32 %v708, %v903
    %v905 = vpop.f32.mrf.mxu0
    %906 = vmatprep.mubr.f32.mxu0 0.0
    %v907 = vand.u32 %v82, 4294901760
    %v908 = vsub.f32 %v82, %v907
    %v909 = vand.u32 %v908, 4294901760
    %910 = vmatmul.mubr.f32.gmra.mxu0 %v909
    %v911 = vpop.f32.mrf.mxu0
    %v912 = vadd.f32 %v715, %v911
    %v913 = vpop.f32.mrf.mxu0
    %914 = vmatprep.mubr.f32.mxu0 0.0
    %v915 = vand.u32 %v83, 4294901760
    %v916 = vsub.f32 %v83, %v915
    %v917 = vand.u32 %v916, 4294901760
    %918 = vmatmul.mubr.f32.gmra.mxu0 %v917
    %v919 = vpop.f32.mrf.mxu0
    %v920 = vadd.f32 %v722, %v919
    %v921 = vpop.f32.mrf.mxu0
    %922 = vmatprep.mubr.f32.mxu0 0.0
    %v923 = vand.u32 %v84, 4294901760
    %v924 = vsub.f32 %v84, %v923
    %v925 = vand.u32 %v924, 4294901760
    %926 = vmatmul.mubr.f32.gmra.mxu0 %v925
    %v927 = vpop.f32.mrf.mxu0
    %v928 = vadd.f32 %v729, %v927
    %v929 = vpop.f32.mrf.mxu0
    %930 = vmatprep.mubr.f32.mxu0 0.0
    %v931 = vand.u32 %v85, 4294901760
    %v932 = vsub.f32 %v85, %v931
    %v933 = vand.u32 %v932, 4294901760
    %934 = vmatmul.mubr.f32.gmra.mxu0 %v933
    %v935 = vpop.f32.mrf.mxu0
    %v936 = vadd.f32 %v736, %v935
    %v937 = vpop.f32.mrf.mxu0
    %938 = vmatprep.mubr.f32.mxu0 0.0
    %v939 = vand.u32 %v86, 4294901760
    %v940 = vsub.f32 %v86, %v939
    %v941 = vand.u32 %v940, 4294901760
    %942 = vmatmul.mubr.f32.gmra.mxu0 %v941
    %v943 = vpop.f32.mrf.mxu0
    %v944 = vadd.f32 %v743, %v943
    %v945 = vpop.f32.mrf.mxu0
    %946 = vmatprep.mubr.f32.mxu0 0.0
    %v947 = vand.u32 %v87, 4294901760
    %v948 = vsub.f32 %v87, %v947
    %v949 = vand.u32 %v948, 4294901760
    %950 = vmatmul.mubr.f32.gmra.mxu0 %v949
    %v951 = vpop.f32.mrf.mxu0
    %v952 = vadd.f32 %v750, %v951
    %v953 = vpop.f32.mrf.mxu0
    %954 = vmatprep.mubr.f32.mxu0 0.0
    %v955 = vand.u32 %v88, 4294901760
    %v956 = vsub.f32 %v88, %v955
    %v957 = vand.u32 %v956, 4294901760
    %958 = vmatmul.mubr.f32.gmra.mxu0 %v957
    %v959 = vpop.f32.mrf.mxu0
    %v960 = vadd.f32 %v757, %v959
    %v961 = vpop.f32.mrf.mxu0
    %962 = vmatprep.mubr.f32.mxu0 0.0
    %v963 = vand.u32 %v89, 4294901760
    %v964 = vsub.f32 %v89, %v963
    %v965 = vand.u32 %v964, 4294901760
    %966 = vmatmul.mubr.f32.gmra.mxu0 %v965
    %v967 = vpop.f32.mrf.mxu0
    %v968 = vadd.f32 %v764, %v967
    %v969 = vpop.f32.mrf.mxu0
    %970 = vmatprep.mubr.f32.mxu0 0.0
    %v971 = vand.u32 %v90, 4294901760
    %v972 = vsub.f32 %v90, %v971
    %v973 = vand.u32 %v972, 4294901760
    %974 = vmatmul.mubr.f32.gmra.mxu0 %v973
    %v975 = vpop.f32.mrf.mxu0
    %v976 = vadd.f32 %v771, %v975
    %v977 = vpop.f32.mrf.mxu0
    %978 = vmatprep.mubr.f32.mxu0 0.0
    %v979 = vand.u32 %v91, 4294901760
    %v980 = vsub.f32 %v91, %v979
    %v981 = vand.u32 %v980, 4294901760
    %982 = vmatmul.mubr.f32.gmra.mxu0 %v981
    %v983 = vpop.f32.mrf.mxu0
    %v984 = vadd.f32 %v778, %v983
    %v985 = vpop.f32.mrf.mxu0
    %986 = vmatprep.mubr.f32.mxu0 0.0
    %v987 = vand.u32 %v92, 4294901760
    %v988 = vsub.f32 %v92, %v987
    %v989 = vand.u32 %v988, 4294901760
    %990 = vmatmul.mubr.f32.gmra.mxu0 %v989
    %v991 = vpop.f32.mrf.mxu0
    %v992 = vadd.f32 %v785, %v991
    %v993 = vpop.f32.mrf.mxu0
    %994 = vmatprep.mubr.f32.mxu0 0.0
    %v995 = vand.u32 %v93, 4294901760
    %v996 = vsub.f32 %v93, %v995
    %v997 = vand.u32 %v996, 4294901760
    %998 = vmatmul.mubr.f32.gmra.mxu0 %v997
    %v999 = vpop.f32.mrf.mxu0
    %v1000 = vadd.f32 %v792, %v999
    %v1001 = vpop.f32.mrf.mxu0
    %1002 = vmatprep.mubr.f32.mxu0 0.0
    %v1003 = vand.u32 %v94, 4294901760
    %v1004 = vsub.f32 %v94, %v1003
    %v1005 = vand.u32 %v1004, 4294901760
    %1006 = vmatmul.mubr.f32.gmra.mxu0 %v1005
    %v1007 = vpop.f32.mrf.mxu0
    %v1008 = vadd.f32 %v799, %v1007
    %v1009 = vpop.f32.mrf.mxu0
    %1010 = vdwg.mxu0
    %1011 = vmatprep.subr.mxu0 0.0
    %v1012 = vand.u32 %v110, 4294901760
    %v1013 = vsub.f32 %v110, %v1012
    %v1014 = vand.u32 %v1013, 4294901760
    %1015 = vmatpush1.msra.mxu0 %v1014
    %1016 = vmatprep.subr.mxu0 0.0
    %v1017 = vand.u32 %v109, 4294901760
    %v1018 = vsub.f32 %v109, %v1017
    %v1019 = vand.u32 %v1018, 4294901760
    %1020 = vmatpush1.msra.mxu0 %v1019
    %1021 = vmatprep.subr.mxu0 0.0
    %v1022 = vand.u32 %v108, 4294901760
    %v1023 = vsub.f32 %v108, %v1022
    %v1024 = vand.u32 %v1023, 4294901760
    %1025 = vmatpush1.msra.mxu0 %v1024
    %1026 = vmatprep.subr.mxu0 0.0
    %v1027 = vand.u32 %v107, 4294901760
    %v1028 = vsub.f32 %v107, %v1027
    %v1029 = vand.u32 %v1028, 4294901760
    %1030 = vmatpush1.msra.mxu0 %v1029
    %1031 = vmatprep.subr.mxu0 0.0
    %v1032 = vand.u32 %v106, 4294901760
    %v1033 = vsub.f32 %v106, %v1032
    %v1034 = vand.u32 %v1033, 4294901760
    %1035 = vmatpush1.msra.mxu0 %v1034
    %1036 = vmatprep.subr.mxu0 0.0
    %v1037 = vand.u32 %v105, 4294901760
    %v1038 = vsub.f32 %v105, %v1037
    %v1039 = vand.u32 %v1038, 4294901760
    %1040 = vmatpush1.msra.mxu0 %v1039
    %1041 = vmatprep.subr.mxu0 0.0
    %v1042 = vand.u32 %v104, 4294901760
    %v1043 = vsub.f32 %v104, %v1042
    %v1044 = vand.u32 %v1043, 4294901760
    %1045 = vmatpush1.msra.mxu0 %v1044
    %1046 = vmatprep.subr.mxu0 0.0
    %v1047 = vand.u32 %v103, 4294901760
    %v1048 = vsub.f32 %v103, %v1047
    %v1049 = vand.u32 %v1048, 4294901760
    %1050 = vmatpush1.msra.mxu0 %v1049
    %1051 = vmatprep.subr.mxu0 0.0
    %v1052 = vand.u32 %v102, 4294901760
    %v1053 = vsub.f32 %v102, %v1052
    %v1054 = vand.u32 %v1053, 4294901760
    %1055 = vmatpush1.msra.mxu0 %v1054
    %1056 = vmatprep.subr.mxu0 0.0
    %v1057 = vand.u32 %v101, 4294901760
    %v1058 = vsub.f32 %v101, %v1057
    %v1059 = vand.u32 %v1058, 4294901760
    %1060 = vmatpush1.msra.mxu0 %v1059
    %1061 = vmatprep.subr.mxu0 0.0
    %v1062 = vand.u32 %v100, 4294901760
    %v1063 = vsub.f32 %v100, %v1062
    %v1064 = vand.u32 %v1063, 4294901760
    %1065 = vmatpush1.msra.mxu0 %v1064
    %1066 = vmatprep.subr.mxu0 0.0
    %v1067 = vand.u32 %v99, 4294901760
    %v1068 = vsub.f32 %v99, %v1067
    %v1069 = vand.u32 %v1068, 4294901760
    %1070 = vmatpush1.msra.mxu0 %v1069
    %1071 = vmatprep.subr.mxu0 0.0
    %v1072 = vand.u32 %v98, 4294901760
    %v1073 = vsub.f32 %v98, %v1072
    %v1074 = vand.u32 %v1073, 4294901760
    %1075 = vmatpush1.msra.mxu0 %v1074
    %1076 = vmatprep.subr.mxu0 0.0
    %v1077 = vand.u32 %v97, 4294901760
    %v1078 = vsub.f32 %v97, %v1077
    %v1079 = vand.u32 %v1078, 4294901760
    %1080 = vmatpush1.msra.mxu0 %v1079
    %1081 = vmatprep.subr.mxu0 0.0
    %v1082 = vand.u32 %v96, 4294901760
    %v1083 = vsub.f32 %v96, %v1082
    %v1084 = vand.u32 %v1083, 4294901760
    %1085 = vmatpush1.msra.mxu0 %v1084
    %1086 = vmatprep.subr.mxu0 0.0
    %v1087 = vand.u32 %v95, 4294901760
    %v1088 = vsub.f32 %v95, %v1087
    %v1089 = vand.u32 %v1088, 4294901760
    %1090 = vmatpush1.msra.mxu0 %v1089
    %1091 = vmatprep.subr.mxu0 0.0
    %1092 = vmatpush2.msra.mxu0 0.0
    %1093 = vmatprep.subr.mxu0 0.0
    %1094 = vmatpush2.msra.mxu0 0.0
    %1095 = vmatprep.subr.mxu0 0.0
    %1096 = vmatpush2.msra.mxu0 0.0
    %1097 = vmatprep.subr.mxu0 0.0
    %1098 = vmatpush2.msra.mxu0 0.0
    %1099 = vmatprep.subr.mxu0 0.0
    %1100 = vmatpush2.msra.mxu0 0.0
    %1101 = vmatprep.subr.mxu0 0.0
    %1102 = vmatpush2.msra.mxu0 0.0
    %1103 = vmatprep.subr.mxu0 0.0
    %1104 = vmatpush2.msra.mxu0 0.0
    %1105 = vmatprep.subr.mxu0 0.0
    %1106 = vmatpush2.msra.mxu0 0.0
    %1107 = vmatprep.subr.mxu0 0.0
    %1108 = vmatpush2.msra.mxu0 0.0
    %1109 = vmatprep.subr.mxu0 0.0
    %1110 = vmatpush2.msra.mxu0 0.0
    %1111 = vmatprep.subr.mxu0 0.0
    %1112 = vmatpush2.msra.mxu0 0.0
    %1113 = vmatprep.subr.mxu0 0.0
    %1114 = vmatpush2.msra.mxu0 0.0
    %1115 = vmatprep.subr.mxu0 0.0
    %1116 = vmatpush2.msra.mxu0 0.0
    %1117 = vmatprep.subr.mxu0 0.0
    %1118 = vmatpush2.msra.mxu0 0.0
    %1119 = vmatprep.subr.mxu0 0.0
    %1120 = vmatpush2.msra.mxu0 0.0
    %1121 = vmatprep.subr.mxu0 0.0
    %1122 = vmatpush2.msra.mxu0 0.0
    %1123 = vmatprep.mubr.f32.mxu0 0.0
    %v1124 = vand.u32 %v79, 4294901760
    %1125 = vmatmul.mubr.f32.gmra.mxu0 %v1124
    %v1126 = vpop.f32.mrf.mxu0
    %v1127 = vadd.f32 %v888, %v1126
    %v1128 = vpop.f32.mrf.mxu0
    %1129 = vmatprep.mubr.f32.mxu0 0.0
    %v1130 = vand.u32 %v80, 4294901760
    %1131 = vmatmul.mubr.f32.gmra.mxu0 %v1130
    %v1132 = vpop.f32.mrf.mxu0
    %v1133 = vadd.f32 %v896, %v1132
    %v1134 = vpop.f32.mrf.mxu0
    %1135 = vmatprep.mubr.f32.mxu0 0.0
    %v1136 = vand.u32 %v81, 4294901760
    %1137 = vmatmul.mubr.f32.gmra.mxu0 %v1136
    %v1138 = vpop.f32.mrf.mxu0
    %v1139 = vadd.f32 %v904, %v1138
    %v1140 = vpop.f32.mrf.mxu0
    %1141 = vmatprep.mubr.f32.mxu0 0.0
    %v1142 = vand.u32 %v82, 4294901760
    %1143 = vmatmul.mubr.f32.gmra.mxu0 %v1142
    %v1144 = vpop.f32.mrf.mxu0
    %v1145 = vadd.f32 %v912, %v1144
    %v1146 = vpop.f32.mrf.mxu0
    %1147 = vmatprep.mubr.f32.mxu0 0.0
    %v1148 = vand.u32 %v83, 4294901760
    %1149 = vmatmul.mubr.f32.gmra.mxu0 %v1148
    %v1150 = vpop.f32.mrf.mxu0
    %v1151 = vadd.f32 %v920, %v1150
    %v1152 = vpop.f32.mrf.mxu0
    %1153 = vmatprep.mubr.f32.mxu0 0.0
    %v1154 = vand.u32 %v84, 4294901760
    %1155 = vmatmul.mubr.f32.gmra.mxu0 %v1154
    %v1156 = vpop.f32.mrf.mxu0
    %v1157 = vadd.f32 %v928, %v1156
    %v1158 = vpop.f32.mrf.mxu0
    %1159 = vmatprep.mubr.f32.mxu0 0.0
    %v1160 = vand.u32 %v85, 4294901760
    %1161 = vmatmul.mubr.f32.gmra.mxu0 %v1160
    %v1162 = vpop.f32.mrf.mxu0
    %v1163 = vadd.f32 %v936, %v1162
    %v1164 = vpop.f32.mrf.mxu0
    %1165 = vmatprep.mubr.f32.mxu0 0.0
    %v1166 = vand.u32 %v86, 4294901760
    %1167 = vmatmul.mubr.f32.gmra.mxu0 %v1166
    %v1168 = vpop.f32.mrf.mxu0
    %v1169 = vadd.f32 %v944, %v1168
    %v1170 = vpop.f32.mrf.mxu0
    %1171 = vmatprep.mubr.f32.mxu0 0.0
    %v1172 = vand.u32 %v87, 4294901760
    %1173 = vmatmul.mubr.f32.gmra.mxu0 %v1172
    %v1174 = vpop.f32.mrf.mxu0
    %v1175 = vadd.f32 %v952, %v1174
    %v1176 = vpop.f32.mrf.mxu0
    %1177 = vmatprep.mubr.f32.mxu0 0.0
    %v1178 = vand.u32 %v88, 4294901760
    %1179 = vmatmul.mubr.f32.gmra.mxu0 %v1178
    %v1180 = vpop.f32.mrf.mxu0
    %v1181 = vadd.f32 %v960, %v1180
    %v1182 = vpop.f32.mrf.mxu0
    %1183 = vmatprep.mubr.f32.mxu0 0.0
    %v1184 = vand.u32 %v89, 4294901760
    %1185 = vmatmul.mubr.f32.gmra.mxu0 %v1184
    %v1186 = vpop.f32.mrf.mxu0
    %v1187 = vadd.f32 %v968, %v1186
    %v1188 = vpop.f32.mrf.mxu0
    %1189 = vmatprep.mubr.f32.mxu0 0.0
    %v1190 = vand.u32 %v90, 4294901760
    %1191 = vmatmul.mubr.f32.gmra.mxu0 %v1190
    %v1192 = vpop.f32.mrf.mxu0
    %v1193 = vadd.f32 %v976, %v1192
    %v1194 = vpop.f32.mrf.mxu0
    %1195 = vmatprep.mubr.f32.mxu0 0.0
    %v1196 = vand.u32 %v91, 4294901760
    %1197 = vmatmul.mubr.f32.gmra.mxu0 %v1196
    %v1198 = vpop.f32.mrf.mxu0
    %v1199 = vadd.f32 %v984, %v1198
    %v1200 = vpop.f32.mrf.mxu0
    %1201 = vmatprep.mubr.f32.mxu0 0.0
    %v1202 = vand.u32 %v92, 4294901760
    %1203 = vmatmul.mubr.f32.gmra.mxu0 %v1202
    %v1204 = vpop.f32.mrf.mxu0
    %v1205 = vadd.f32 %v992, %v1204
    %v1206 = vpop.f32.mrf.mxu0
    %1207 = vmatprep.mubr.f32.mxu0 0.0
    %v1208 = vand.u32 %v93, 4294901760
    %1209 = vmatmul.mubr.f32.gmra.mxu0 %v1208
    %v1210 = vpop.f32.mrf.mxu0
    %v1211 = vadd.f32 %v1000, %v1210
    %v1212 = vpop.f32.mrf.mxu0
    %1213 = vmatprep.mubr.f32.mxu0 0.0
    %v1214 = vand.u32 %v94, 4294901760
    %1215 = vmatmul.mubr.f32.gmra.mxu0 %v1214
    %v1216 = vpop.f32.mrf.mxu0
    %v1217 = vadd.f32 %v1008, %v1216
    %v1218 = vpop.f32.mrf.mxu0
    %1219 = vdwg.mxu0
    %1220 = vmatprep.subr.mxu0 0.0
    %v1221 = vand.u32 %v110, 4294901760
    %1222 = vmatpush1.msra.mxu0 %v1221
    %1223 = vmatprep.subr.mxu0 0.0
    %v1224 = vand.u32 %v109, 4294901760
    %1225 = vmatpush1.msra.mxu0 %v1224
    %1226 = vmatprep.subr.mxu0 0.0
    %v1227 = vand.u32 %v108, 4294901760
    %1228 = vmatpush1.msra.mxu0 %v1227
    %1229 = vmatprep.subr.mxu0 0.0
    %v1230 = vand.u32 %v107, 4294901760
    %1231 = vmatpush1.msra.mxu0 %v1230
    %1232 = vmatprep.subr.mxu0 0.0
    %v1233 = vand.u32 %v106, 4294901760
    %1234 = vmatpush1.msra.mxu0 %v1233
    %1235 = vmatprep.subr.mxu0 0.0
    %v1236 = vand.u32 %v105, 4294901760
    %1237 = vmatpush1.msra.mxu0 %v1236
    %1238 = vmatprep.subr.mxu0 0.0
    %v1239 = vand.u32 %v104, 4294901760
    %1240 = vmatpush1.msra.mxu0 %v1239
    %1241 = vmatprep.subr.mxu0 0.0
    %v1242 = vand.u32 %v103, 4294901760
    %1243 = vmatpush1.msra.mxu0 %v1242
    %1244 = vmatprep.subr.mxu0 0.0
    %v1245 = vand.u32 %v102, 4294901760
    %1246 = vmatpush1.msra.mxu0 %v1245
    %1247 = vmatprep.subr.mxu0 0.0
    %v1248 = vand.u32 %v101, 4294901760
    %1249 = vmatpush1.msra.mxu0 %v1248
    %1250 = vmatprep.subr.mxu0 0.0
    %v1251 = vand.u32 %v100, 4294901760
    %1252 = vmatpush1.msra.mxu0 %v1251
    %1253 = vmatprep.subr.mxu0 0.0
    %v1254 = vand.u32 %v99, 4294901760
    %1255 = vmatpush1.msra.mxu0 %v1254
    %1256 = vmatprep.subr.mxu0 0.0
    %v1257 = vand.u32 %v98, 4294901760
    %1258 = vmatpush1.msra.mxu0 %v1257
    %1259 = vmatprep.subr.mxu0 0.0
    %v1260 = vand.u32 %v97, 4294901760
    %1261 = vmatpush1.msra.mxu0 %v1260
    %1262 = vmatprep.subr.mxu0 0.0
    %v1263 = vand.u32 %v96, 4294901760
    %1264 = vmatpush1.msra.mxu0 %v1263
    %1265 = vmatprep.subr.mxu0 0.0
    %v1266 = vand.u32 %v95, 4294901760
    %1267 = vmatpush1.msra.mxu0 %v1266
    %1268 = vmatprep.subr.mxu0 0.0
    %1269 = vmatpush2.msra.mxu0 0.0
    %1270 = vmatprep.subr.mxu0 0.0
    %1271 = vmatpush2.msra.mxu0 0.0
    %1272 = vmatprep.subr.mxu0 0.0
    %1273 = vmatpush2.msra.mxu0 0.0
    %1274 = vmatprep.subr.mxu0 0.0
    %1275 = vmatpush2.msra.mxu0 0.0
    %1276 = vmatprep.subr.mxu0 0.0
    %1277 = vmatpush2.msra.mxu0 0.0
    %1278 = vmatprep.subr.mxu0 0.0
    %1279 = vmatpush2.msra.mxu0 0.0
    %1280 = vmatprep.subr.mxu0 0.0
    %1281 = vmatpush2.msra.mxu0 0.0
    %1282 = vmatprep.subr.mxu0 0.0
    %1283 = vmatpush2.msra.mxu0 0.0
    %1284 = vmatprep.subr.mxu0 0.0
    %1285 = vmatpush2.msra.mxu0 0.0
    %1286 = vmatprep.subr.mxu0 0.0
    %1287 = vmatpush2.msra.mxu0 0.0
    %1288 = vmatprep.subr.mxu0 0.0
    %1289 = vmatpush2.msra.mxu0 0.0
    %1290 = vmatprep.subr.mxu0 0.0
    %1291 = vmatpush2.msra.mxu0 0.0
    %1292 = vmatprep.subr.mxu0 0.0
    %1293 = vmatpush2.msra.mxu0 0.0
    %1294 = vmatprep.subr.mxu0 0.0
    %1295 = vmatpush2.msra.mxu0 0.0
    %1296 = vmatprep.subr.mxu0 0.0
    %1297 = vmatpush2.msra.mxu0 0.0
    %1298 = vmatprep.subr.mxu0 0.0
    %1299 = vmatpush2.msra.mxu0 0.0
    %1300 = vmatprep.mubr.f32.mxu0 0.0
    %v1301 = vand.u32 %v79, 4294901760
    %1302 = vmatmul.mubr.f32.gmra.mxu0 %v1301
    %v1303 = vpop.f32.mrf.mxu0
    %v1304 = vadd.f32 %v1127, %v1303
    %v1305 = vpop.f32.mrf.mxu0
    %1306 = vmatprep.mubr.f32.mxu0 0.0
    %v1307 = vand.u32 %v80, 4294901760
    %1308 = vmatmul.mubr.f32.gmra.mxu0 %v1307
    %v1309 = vpop.f32.mrf.mxu0
    %v1310 = vadd.f32 %v1133, %v1309
    %v1311 = vpop.f32.mrf.mxu0
    %1312 = vmatprep.mubr.f32.mxu0 0.0
    %v1313 = vand.u32 %v81, 4294901760
    %1314 = vmatmul.mubr.f32.gmra.mxu0 %v1313
    %v1315 = vpop.f32.mrf.mxu0
    %v1316 = vadd.f32 %v1139, %v1315
    %v1317 = vpop.f32.mrf.mxu0
    %1318 = vmatprep.mubr.f32.mxu0 0.0
    %v1319 = vand.u32 %v82, 4294901760
    %1320 = vmatmul.mubr.f32.gmra.mxu0 %v1319
    %v1321 = vpop.f32.mrf.mxu0
    %v1322 = vadd.f32 %v1145, %v1321
    %v1323 = vpop.f32.mrf.mxu0
    %1324 = vmatprep.mubr.f32.mxu0 0.0
    %v1325 = vand.u32 %v83, 4294901760
    %1326 = vmatmul.mubr.f32.gmra.mxu0 %v1325
    %v1327 = vpop.f32.mrf.mxu0
    %v1328 = vadd.f32 %v1151, %v1327
    %v1329 = vpop.f32.mrf.mxu0
    %1330 = vmatprep.mubr.f32.mxu0 0.0
    %v1331 = vand.u32 %v84, 4294901760
    %1332 = vmatmul.mubr.f32.gmra.mxu0 %v1331
    %v1333 = vpop.f32.mrf.mxu0
    %v1334 = vadd.f32 %v1157, %v1333
    %v1335 = vpop.f32.mrf.mxu0
    %1336 = vmatprep.mubr.f32.mxu0 0.0
    %v1337 = vand.u32 %v85, 4294901760
    %1338 = vmatmul.mubr.f32.gmra.mxu0 %v1337
    %v1339 = vpop.f32.mrf.mxu0
    %v1340 = vadd.f32 %v1163, %v1339
    %v1341 = vpop.f32.mrf.mxu0
    %1342 = vmatprep.mubr.f32.mxu0 0.0
    %v1343 = vand.u32 %v86, 4294901760
    %1344 = vmatmul.mubr.f32.gmra.mxu0 %v1343
    %v1345 = vpop.f32.mrf.mxu0
    %v1346 = vadd.f32 %v1169, %v1345
    %v1347 = vpop.f32.mrf.mxu0
    %1348 = vmatprep.mubr.f32.mxu0 0.0
    %v1349 = vand.u32 %v87, 4294901760
    %1350 = vmatmul.mubr.f32.gmra.mxu0 %v1349
    %v1351 = vpop.f32.mrf.mxu0
    %v1352 = vadd.f32 %v1175, %v1351
    %v1353 = vpop.f32.mrf.mxu0
    %1354 = vmatprep.mubr.f32.mxu0 0.0
    %v1355 = vand.u32 %v88, 4294901760
    %1356 = vmatmul.mubr.f32.gmra.mxu0 %v1355
    %v1357 = vpop.f32.mrf.mxu0
    %v1358 = vadd.f32 %v1181, %v1357
    %v1359 = vpop.f32.mrf.mxu0
    %1360 = vmatprep.mubr.f32.mxu0 0.0
    %v1361 = vand.u32 %v89, 4294901760
    %1362 = vmatmul.mubr.f32.gmra.mxu0 %v1361
    %v1363 = vpop.f32.mrf.mxu0
    %v1364 = vadd.f32 %v1187, %v1363
    %v1365 = vpop.f32.mrf.mxu0
    %1366 = vmatprep.mubr.f32.mxu0 0.0
    %v1367 = vand.u32 %v90, 4294901760
    %1368 = vmatmul.mubr.f32.gmra.mxu0 %v1367
    %v1369 = vpop.f32.mrf.mxu0
    %v1370 = vadd.f32 %v1193, %v1369
    %v1371 = vpop.f32.mrf.mxu0
    %1372 = vmatprep.mubr.f32.mxu0 0.0
    %v1373 = vand.u32 %v91, 4294901760
    %1374 = vmatmul.mubr.f32.gmra.mxu0 %v1373
    %v1375 = vpop.f32.mrf.mxu0
    %v1376 = vadd.f32 %v1199, %v1375
    %v1377 = vpop.f32.mrf.mxu0
    %1378 = vmatprep.mubr.f32.mxu0 0.0
    %v1379 = vand.u32 %v92, 4294901760
    %1380 = vmatmul.mubr.f32.gmra.mxu0 %v1379
    %v1381 = vpop.f32.mrf.mxu0
    %v1382 = vadd.f32 %v1205, %v1381
    %v1383 = vpop.f32.mrf.mxu0
    %1384 = vmatprep.mubr.f32.mxu0 0.0
    %v1385 = vand.u32 %v93, 4294901760
    %1386 = vmatmul.mubr.f32.gmra.mxu0 %v1385
    %v1387 = vpop.f32.mrf.mxu0
    %v1388 = vadd.f32 %v1211, %v1387
    %v1389 = vpop.f32.mrf.mxu0
    %1390 = vmatprep.mubr.f32.mxu0 0.0
    %v1391 = vand.u32 %v94, 4294901760
    %1392 = vmatmul.mubr.f32.gmra.mxu0 %v1391
    %v1393 = vpop.f32.mrf.mxu0
    %v1394 = vadd.f32 %v1217, %v1393
    %v1395 = vpop.f32.mrf.mxu0
    %1396 = vdwg.mxu0
    %v1397 = vadd.f32 %v63, %v1304
    %v1398 = vadd.f32 %v64, %v1310
    %v1399 = vadd.f32 %v65, %v1316
    %v1400 = vadd.f32 %v66, %v1322
    %v1401 = vadd.f32 %v67, %v1328
    %v1402 = vadd.f32 %v68, %v1334
    %v1403 = vadd.f32 %v69, %v1340
    %v1404 = vadd.f32 %v70, %v1346
    %v1405 = vadd.f32 %v71, %v1352
    %v1406 = vadd.f32 %v72, %v1358
    %v1407 = vadd.f32 %v73, %v1364
    %v1408 = vadd.f32 %v74, %v1370
    %v1409 = vadd.f32 %v75, %v1376
    %v1410 = vadd.f32 %v76, %v1382
    %v1411 = vadd.f32 %v77, %v1388
    %v1412 = vadd.f32 %v78, %v1394
    %1413 = vst [vmem:[#allocation2] sm:$0xff] %v1397
    %1414 = vst [vmem:[#allocation2 + $0x8] sm:$0xff] %v1398
    %1415 = vst [vmem:[#allocation2 + $0x10] sm:$0xff] %v1399
    %1416 = vst [vmem:[#allocation2 + $0x18] sm:$0xff] %v1400
    %1417 = vst [vmem:[#allocation2 + $0x20] sm:$0xff] %v1401
    %1418 = vst [vmem:[#allocation2 + $0x28] sm:$0xff] %v1402
    %1419 = vst [vmem:[#allocation2 + $0x30] sm:$0xff] %v1403
    %1420 = vst [vmem:[#allocation2 + $0x38] sm:$0xff] %v1404
    %1421 = vst [vmem:[#allocation2 + $0x40] sm:$0xff] %v1405
    %1422 = vst [vmem:[#allocation2 + $0x48] sm:$0xff] %v1406
    %1423 = vst [vmem:[#allocation2 + $0x50] sm:$0xff] %v1407
    %1424 = vst [vmem:[#allocation2 + $0x58] sm:$0xff] %v1408
    %1425 = vst [vmem:[#allocation2 + $0x60] sm:$0xff] %v1409
    %1426 = vst [vmem:[#allocation2 + $0x68] sm:$0xff] %v1410
    %1427 = vst [vmem:[#allocation2 + $0x70] sm:$0xff] %v1411
    %1428 = vst [vmem:[#allocation2 + $0x78] sm:$0xff] %v1412
    // Predicated region
    $region26: #{tpu_custom_call.1} parent=1 // pred_check
      %p1429 = pneg %p43
    $region27: #{tpu_custom_call.1} parent=1 // pred_check_branch
      %1431 = sbr.rel (%p1429) target = $region29
    $region28: #{tpu_custom_call.1} parent=1 // pred_region
      %v1432 = vld [vmem:[#allocation2] sm:$0xff]
      %v1433 = vld [vmem:[#allocation2 + $0x8] sm:$0xff]
      %v1434 = vld [vmem:[#allocation2 + $0x10] sm:$0xff]
      %v1435 = vld [vmem:[#allocation2 + $0x18] sm:$0xff]
      %v1436 = vld [vmem:[#allocation2 + $0x20] sm:$0xff]
      %v1437 = vld [vmem:[#allocation2 + $0x28] sm:$0xff]
      %v1438 = vld [vmem:[#allocation2 + $0x30] sm:$0xff]
      %v1439 = vld [vmem:[#allocation2 + $0x38] sm:$0xff]
      %v1440 = vld [vmem:[#allocation2 + $0x40] sm:$0xff]
      %v1441 = vld [vmem:[#allocation2 + $0x48] sm:$0xff]
      %v1442 = vld [vmem:[#allocation2 + $0x50] sm:$0xff]
      %v1443 = vld [vmem:[#allocation2 + $0x58] sm:$0xff]
      %v1444 = vld [vmem:[#allocation2 + $0x60] sm:$0xff]
      %v1445 = vld [vmem:[#allocation2 + $0x68] sm:$0xff]
      %v1446 = vld [vmem:[#allocation2 + $0x70] sm:$0xff]
      %v1447 = vld [vmem:[#allocation2 + $0x78] sm:$0xff]
      %v1448 = vld [vmem:[%s2] sm:$0x1]
      %v1450 = vlaneseq
      %v1451 = vshrl.u32 %v1450, 7
      %v1452 = vsub.s32 0, %v1451
      %v1453 = vrot.slane %v1448, %v1452
      %v1455 = vadd.f32 %v1432, %v1453
      %v1456 = vadd.f32 %v1433, %v1453
      %v1457 = vadd.f32 %v1434, %v1453
      %v1458 = vadd.f32 %v1435, %v1453
      %v1459 = vadd.f32 %v1436, %v1453
      %v1460 = vadd.f32 %v1437, %v1453
      %v1461 = vadd.f32 %v1438, %v1453
      %v1462 = vadd.f32 %v1439, %v1453
      %v1463 = vadd.f32 %v1440, %v1453
      %v1464 = vadd.f32 %v1441, %v1453
      %v1465 = vadd.f32 %v1442, %v1453
      %v1466 = vadd.f32 %v1443, %v1453
      %v1467 = vadd.f32 %v1444, %v1453
      %v1468 = vadd.f32 %v1445, %v1453
      %v1469 = vadd.f32 %v1446, %v1453
      %v1470 = vadd.f32 %v1447, %v1453
      %1471 = vst [vmem:[#allocation8] sm:$0xff] %v1455
      %1472 = vst [vmem:[#allocation8 + $0x8] sm:$0xff] %v1456
      %1473 = vst [vmem:[#allocation8 + $0x10] sm:$0xff] %v1457
      %1474 = vst [vmem:[#allocation8 + $0x18] sm:$0xff] %v1458
      %1475 = vst [vmem:[#allocation8 + $0x20] sm:$0xff] %v1459
      %1476 = vst [vmem:[#allocation8 + $0x28] sm:$0xff] %v1460
      %1477 = vst [vmem:[#allocation8 + $0x30] sm:$0xff] %v1461
      %1478 = vst [vmem:[#allocation8 + $0x38] sm:$0xff] %v1462
      %1479 = vst [vmem:[#allocation8 + $0x40] sm:$0xff] %v1463
      %1480 = vst [vmem:[#allocation8 + $0x48] sm:$0xff] %v1464
      %1481 = vst [vmem:[#allocation8 + $0x50] sm:$0xff] %v1465
      %1482 = vst [vmem:[#allocation8 + $0x58] sm:$0xff] %v1466
      %1483 = vst [vmem:[#allocation8 + $0x60] sm:$0xff] %v1467
      %1484 = vst [vmem:[#allocation8 + $0x68] sm:$0xff] %v1468
      %1485 = vst [vmem:[#allocation8 + $0x70] sm:$0xff] %v1469
      %1486 = vst [vmem:[#allocation8 + $0x78] sm:$0xff] %v1470
    $region29: #{tpu_custom_call.1} parent=1 // pred_fallthru
      _
    // Predicated region
    $region30: #{tpu_custom_call.1} parent=1 // pred_check
      _
    $region31: #{tpu_custom_call.1} parent=1 // pred_check_branch
      %1488 = sbr.rel (0) target = $region33
    $region32: #{tpu_custom_call.1} parent=1 // pred_region
      %s1490 = ssub.s32 2048, 2048
      %1491 = vsyncadd [#allocation5], %s1490
      %s1492 = sshll.u32 [#allocation8], 4
      %s1493 = int_to_ptr.vmem [resolvable:$true] %s1492
      %1498 = dma.vmem_to_hbm [thread:$0]  %s1493, 2048, %s3, [#allocation5], 128, 128, 8
    $region33: #{tpu_custom_call.1} parent=1 // pred_fallthru
      _
    // Predicated region
    $region34: #{tpu_custom_call.1} parent=1 // pred_check
      _
    $region35: #{tpu_custom_call.1} parent=1 // pred_check_branch
      %1500 = sbr.rel (0) target = $region37
    $region36: #{tpu_custom_call.1} parent=1 // pred_region
      %1501 = dma.done [#allocation5], 2048
    $region37: #{tpu_custom_call.1} parent=1 // pred_fallthru
      _
    %1502 = vsyncpa [#allocation4], 1
    %1503 = vsyncpa [#allocation7], 1
    %1504 = vsyncpa [#allocation5], 1

</llo_original>
